<compile_context>
chip_gen: v5e
topology: v5e:2x2
jax: 0.10.0
libtpu: 0.0.40
codegen_flags: <defaults>
</compile_context>

<pallas_src>
import functools

import jax
import jax.numpy as jnp
import numpy as np
from jax import lax
from jax.experimental import pallas as pl
from jax.experimental.pallas import tpu as pltpu

# ---------------------------------------------------------------------------
# Small synthetic DistilBERT-like config.
# ---------------------------------------------------------------------------
VOCAB = 64
MAX_POS = 16
DIM = 128            # model dim (lane axis)
N_HEADS = 4
HEAD_DIM = DIM // N_HEADS
FFN_DIM = 256
N_LAYERS = 2
LN_EPS = 1e-12
TARGET_TOKEN_IDX = 0  # TextEncoder.target_token_idx
NEG_BIAS = -1e9       # bounded additive mask (finfo(f32).min overflows to -inf)
SP_ROWS = 16          # rows of the packed small-params operand (sublane multiple)


# ---------------------------------------------------------------------------
# In-kernel math helpers (only ops that lower cleanly in Mosaic).
# ---------------------------------------------------------------------------
def _erf(x):
    # Abramowitz & Stegun 7.1.26 (|err| < 1.5e-7).  Exact reciprocal here
    # (approx vrcp would blow the polynomial's error budget); exp -> EUP.
    a1, a2, a3, a4, a5 = 0.254829592, -0.284496736, 1.421413741, -1.453152027, 1.061405429
    p = 0.3275911
    sgn = jnp.where(x >= 0.0, 1.0, -1.0)
    ax = jnp.abs(x)
    t = 1.0 / (1.0 + p * ax)
    poly = ((((a5 * t + a4) * t + a3) * t + a2) * t + a1) * t
    return sgn * (1.0 - poly * jnp.exp(-ax * ax))


def _gelu(x):
    # exact-erf GELU (DistilBERT "gelu")
    return 0.5 * x * (1.0 + _erf(x * jnp.float32(1.0 / np.sqrt(2.0))))


def _layernorm(x, g, b):
    mu = jnp.mean(x, axis=-1, keepdims=True)
    xc = x - mu
    var = jnp.mean(xc * xc, axis=-1, keepdims=True)
    return xc * lax.rsqrt(var + LN_EPS) * g + b


# ---------------------------------------------------------------------------
# Pallas kernel: grid = (layer,).  The whole batch lives in the block; the
# hidden state (B*S, D) is carried in a VMEM scratch across the sequential
# ("arbitrary") layer axis.  Per-layer weights are double-buffered blocks.
# ---------------------------------------------------------------------------
def _encoder_kernel(batch, seq, n_heads,
                    emb_ref, bias_ref,
                    wqkv_ref, wo_ref, w1_ref, w2_ref, sp_ref,
                    out_ref, h_ref):
    layer = pl.program_id(0)
    BS, D = h_ref.shape
    F = w1_ref.shape[-1]
    hd = D // n_heads

    # ---- unpack the single packed small-params block (16, 3D) --------------
    bqkv = sp_ref[0:1, :]          # (1, 3D)   q-bias already scaled by 1/sqrt(hd)
    bo = sp_ref[1:2, :D]
    b1 = sp_ref[2:3, :F]
    b2 = sp_ref[3:4, :D]
    ln1g = sp_ref[4:5, :D]
    ln1b = sp_ref[5:6, :D]
    ln2g = sp_ref[6:7, :D]
    ln2b = sp_ref[7:8, :D]
    lneg = sp_ref[8:9, :D]
    lneb = sp_ref[9:10, :D]

    # layer 0: embedding LayerNorm initializes the carried hidden state.
    @pl.when(layer == 0)
    def _():
        h_ref[...] = _layernorm(emb_ref[...], lneg, lneb)

    x = h_ref[...]                                   # (B*S, D) f32
    xb = x.astype(jnp.bfloat16)

    # ---- fused QKV projection (bf16 MXU, f32 accumulate), M = B*S rows -----
    qkv = jnp.dot(xb, wqkv_ref[...], preferred_element_type=jnp.float32) + bqkv
    q, k, v = qkv[:, :D], qkv[:, D:2 * D], qkv[:, 2 * D:]   # 1/sqrt(hd) folded into q

    def split_heads(a):                              # (B*S, D) -> (H, B*S, hd) bf16
        return jnp.stack([a[:, h * hd:(h + 1) * hd] for h in range(n_heads)],
                         axis=0).astype(jnp.bfloat16)

    q3, k3, v3 = split_heads(q), split_heads(k), split_heads(v)

    # ---- attention: heads as batch dim; cross-batch blocked by the bias ----
    scores = jnp.einsum('hqd,hkd->hqk', q3, k3,
                        preferred_element_type=jnp.float32)   # (H, B*S, B*S) f32
    scores = scores + bias_ref[...]                           # (1, B*S, B*S) additive bias
    m = jnp.max(scores, axis=-1, keepdims=True)
    p = jnp.exp(scores - m)
    p = p * pl.reciprocal(jnp.sum(p, axis=-1, keepdims=True), approx=True)
    ctx3 = jnp.einsum('hqk,hkd->hqd', p.astype(jnp.bfloat16), v3,
                      preferred_element_type=jnp.float32)     # (H, B*S, hd)
    ctx = jnp.concatenate([ctx3[h] for h in range(n_heads)], axis=1)  # (B*S, D)

    sa = jnp.dot(ctx.astype(jnp.bfloat16), wo_ref[...],
                 preferred_element_type=jnp.float32) + bo
    h1 = _layernorm(sa + x, ln1g, ln1b)                       # sa_layer_norm

    # ---- feed-forward -------------------------------------------------------
    f = jnp.dot(h1.astype(jnp.bfloat16), w1_ref[...],
                preferred_element_type=jnp.float32) + b1
    f = _gelu(f)
    f = jnp.dot(f.astype(jnp.bfloat16), w2_ref[...],
                preferred_element_type=jnp.float32) + b2
    h2 = _layernorm(f + h1, ln2g, ln2b)                       # output_layer_norm
    h_ref[...] = h2

    # last layer: emit last_hidden_state[:, target_token_idx, :] for all b
    @pl.when(layer == pl.num_programs(0) - 1)
    def _():
        rows = [h2[b * seq + TARGET_TOKEN_IDX: b * seq + TARGET_TOKEN_IDX + 1, :]
                for b in range(batch)]
        out_ref[...] = jnp.concatenate(rows, axis=0)          # (B, D) lane-dense store


# ---------------------------------------------------------------------------
# Parameters.  Raw params (f32, unfused) feed the reference; kernel params are
# prepared ONCE: QKV fused, 1/sqrt(head_dim) folded into Wq/bq, weights bf16,
# all small per-layer vectors packed into one (L, 16, 3D) f32 operand.
# Linear weights are [in, out] so y = x @ W + b matches nn.Linear.
# ---------------------------------------------------------------------------
def init_params(key):
    def nrm(k, shape, scale=0.02):
        return scale * jax.random.normal(k, shape, dtype=jnp.float32)

    ks = jax.random.split(key, 14)
    L, D, F = N_LAYERS, DIM, FFN_DIM
    return dict(
        word_emb=nrm(ks[0], (VOCAB, D)),
        pos_emb=nrm(ks[1], (MAX_POS, D)),
        ln_e_g=jnp.ones((1, D), jnp.float32),
        ln_e_b=jnp.zeros((1, D), jnp.float32),
        qw=nrm(ks[2], (L, D, D)), qb=nrm(ks[3], (L, 1, D), 0.01),
        kw=nrm(ks[4], (L, D, D)), kb=nrm(ks[5], (L, 1, D), 0.01),
        vw=nrm(ks[6], (L, D, D)), vb=nrm(ks[7], (L, 1, D), 0.01),
        ow=nrm(ks[8], (L, D, D)), ob=nrm(ks[9], (L, 1, D), 0.01),
        ln1g=jnp.ones((L, 1, D), jnp.float32), ln1b=jnp.zeros((L, 1, D), jnp.float32),
        w1=nrm(ks[10], (L, D, F)), b1=nrm(ks[11], (L, 1, F), 0.01),
        w2=nrm(ks[12], (L, F, D)), b2=nrm(ks[13], (L, 1, D), 0.01),
        ln2g=jnp.ones((L, 1, D), jnp.float32), ln2b=jnp.zeros((L, 1, D), jnp.float32),
    )


def prepare_kernel_params(p):
    scale = jnp.float32(1.0 / np.sqrt(HEAD_DIM))
    L, D, F = N_LAYERS, DIM, FFN_DIM
    bf = lambda a: a.astype(jnp.bfloat16)

    # packed small params: rows = [bqkv, bo, b1, b2, ln1g, ln1b, ln2g, ln2b,
    #                              ln_e_g, ln_e_b, 0-pad...]
    sp = jnp.zeros((L, SP_ROWS, 3 * D), jnp.float32)
    bqkv = jnp.concatenate([p["qb"] * scale, p["kb"], p["vb"]], axis=2)   # (L,1,3D)
    sp = sp.at[:, 0:1, :].set(bqkv)
    sp = sp.at[:, 1:2, :D].set(p["ob"])
    sp = sp.at[:, 2:3, :F].set(p["b1"])
    sp = sp.at[:, 3:4, :D].set(p["b2"])
    sp = sp.at[:, 4:5, :D].set(p["ln1g"])
    sp = sp.at[:, 5:6, :D].set(p["ln1b"])
    sp = sp.at[:, 6:7, :D].set(p["ln2g"])
    sp = sp.at[:, 7:8, :D].set(p["ln2b"])
    sp = sp.at[:, 8:9, :D].set(jnp.broadcast_to(p["ln_e_g"][None], (L, 1, D)))
    sp = sp.at[:, 9:10, :D].set(jnp.broadcast_to(p["ln_e_b"][None], (L, 1, D)))

    return dict(
        word_emb=p["word_emb"], pos_emb=p["pos_emb"],
        wqkv=bf(jnp.concatenate([p["qw"] * scale, p["kw"], p["vw"]], axis=2)),
        wo=bf(p["ow"]), w1=bf(p["w1"]), w2=bf(p["w2"]),
        small=sp,
    )


def text_encoder_forward(kparams, input_ids, attention_mask):
    """Equivalent of TextEncoder.forward(input_ids, attention_mask)."""
    B, S = input_ids.shape
    D, F = DIM, FFN_DIM
    BS = B * S

    # Embedding gather (glue, stays in JAX) -> flattened (B*S, D) rows.
    emb = (jnp.take(kparams["word_emb"], input_ids, axis=0)
           + kparams["pos_emb"][:S][None, :, :]).reshape(BS, D).astype(jnp.float32)

    # Combined additive attention bias, shared by all heads / layers:
    #   * block-diagonal over batch (batch is folded into the token rows)
    #   * key-side attention_mask; bounded -1e9 avoids -inf / NaN hazards.
    batch_ids = jnp.arange(BS, dtype=jnp.int32) // S
    same_batch = batch_ids[:, None] == batch_ids[None, :]                 # (BS, BS)
    key_ok = (attention_mask != 0).reshape(BS)[None, :]                   # (1, BS)
    bias = jnp.where(same_batch & key_ok, 0.0, NEG_BIAS).astype(jnp.float32)[None]  # (1,BS,BS)

    kernel = functools.partial(_encoder_kernel, B, S, N_HEADS)

    grid_spec = pltpu.PrefetchScalarGridSpec(
        num_scalar_prefetch=0,
        grid=(N_LAYERS,),
        in_specs=[
            pl.BlockSpec((BS, D), lambda l: (0, 0)),                         # embeddings (layer-invariant)
            pl.BlockSpec((1, BS, BS), lambda l: (0, 0, 0)),                  # attn bias (layer-invariant)
            pl.BlockSpec((pl.Squeezed(), D, 3 * D), lambda l: (l, 0, 0)),    # Wqkv (bf16)
            pl.BlockSpec((pl.Squeezed(), D, D), lambda l: (l, 0, 0)),        # Wo   (bf16)
            pl.BlockSpec((pl.Squeezed(), D, F), lambda l: (l, 0, 0)),        # W1   (bf16)
            pl.BlockSpec((pl.Squeezed(), F, D), lambda l: (l, 0, 0)),        # W2   (bf16)
            pl.BlockSpec((pl.Squeezed(), SP_ROWS, 3 * D), lambda l: (l, 0, 0)),  # packed small params
        ],
        out_specs=pl.BlockSpec((B, D), lambda l: (0, 0)),
        scratch_shapes=[pltpu.VMEM((BS, D), jnp.float32)],                   # carried hidden state
    )

    out = pl.pallas_call(
        kernel,
        out_shape=jax.ShapeDtypeStruct((B, D), jnp.float32),
        grid_spec=grid_spec,
        compiler_params=pltpu.CompilerParams(
            # Layer axis carries the hidden state -> must stay sequential.
            dimension_semantics=("arbitrary",),
            # vmem_limit_bytes left at default: <1 MiB of per-layer weights here.
            # At real DistilBERT sizes, raise it (and/or Buffered(1) the FFN
            # weights) for v7x/v5e scoped-VMEM limits.
        ),
    )(emb, bias, kparams["wqkv"], kparams["wo"], kparams["w1"],
      kparams["w2"], kparams["small"])
    return out


# ---------------------------------------------------------------------------
# Pure-JAX f32 reference (same math) for a correctness check.
# ---------------------------------------------------------------------------
def reference_forward(params, input_ids, attention_mask):
    def ln(x, g, b):
        mu = jnp.mean(x, axis=-1, keepdims=True)
        xc = x - mu
        var = jnp.mean(xc * xc, axis=-1, keepdims=True)
        return xc * lax.rsqrt(var + LN_EPS) * g + b

    B, S = input_ids.shape
    x = jnp.take(params["word_emb"], input_ids, axis=0) + params["pos_emb"][:S][None]
    x = ln(x, params["ln_e_g"][0], params["ln_e_b"][0])
    mask = attention_mask.astype(jnp.float32)
    neg = jnp.float32(np.finfo(np.float32).min)
    for l in range(N_LAYERS):
        q = (x @ params["qw"][l] + params["qb"][l]).reshape(B, S, N_HEADS, HEAD_DIM)
        k = (x @ params["kw"][l] + params["kb"][l]).reshape(B, S, N_HEADS, HEAD_DIM)
        v = (x @ params["vw"][l] + params["vb"][l]).reshape(B, S, N_HEADS, HEAD_DIM)
        q = q / np.sqrt(HEAD_DIM)
        scores = jnp.einsum("bqhd,bkhd->bhqk", q, k)
        scores = jnp.where(mask[:, None, None, :] != 0.0, scores, neg)
        w = jax.nn.softmax(scores, axis=-1)
        ctx = jnp.einsum("bhqk,bkhd->bqhd", w, v).reshape(B, S, DIM)
        sa = ctx @ params["ow"][l] + params["ob"][l]
        x = ln(sa + x, params["ln1g"][l][0], params["ln1b"][l][0])
        f = jax.nn.gelu(x @ params["w1"][l] + params["b1"][l], approximate=False)
        f = f @ params["w2"][l] + params["b2"][l]
        x = ln(f + x, params["ln2g"][l][0], params["ln2b"][l][0])
    return x[:, TARGET_TOKEN_IDX, :]


if __name__ == "__main__":
    key = jax.random.PRNGKey(0)
    pkey, ikey = jax.random.split(key)
    params = init_params(pkey)
    kparams = prepare_kernel_params(params)   # one-time weight fusion / packing / bf16 cast

    B, S = 2, 8
    input_ids = jax.random.randint(ikey, (B, S), 0, VOCAB, dtype=jnp.int32)
    attention_mask = jnp.array([[1] * S, [1] * (S - 3) + [0] * 3], dtype=jnp.int32)

    out = text_encoder_forward(kparams, input_ids, attention_mask)
    out = jax.block_until_ready(out)

    ref = reference_forward(params, input_ids, attention_mask)
    # bf16 MXU inputs (f32 accumulate) -> slightly looser tolerance than pure-f32.
    np.testing.assert_allclose(np.asarray(out), np.asarray(ref), rtol=2e-2, atol=2e-2)

    print("KERNEL_OK")
</pallas_src>

<mosaic_0001>
module attributes {stable_mosaic.version = 11 : i64} {
  func.func @_encoder_kernel(%arg0: i32, %arg1: memref<16x128xf32, #tpu.memory_space<vmem>>, %arg2: memref<1x16x16xf32, #tpu.memory_space<vmem>>, %arg3: memref<1x128x384xbf16, #tpu.memory_space<vmem>>, %arg4: memref<1x128x128xbf16, #tpu.memory_space<vmem>>, %arg5: memref<1x128x256xbf16, #tpu.memory_space<vmem>>, %arg6: memref<1x256x128xbf16, #tpu.memory_space<vmem>>, %arg7: memref<1x16x384xf32, #tpu.memory_space<vmem>>, %arg8: memref<2x128xf32, #tpu.memory_space<vmem>>, %arg9: memref<16x128xf32, #tpu.memory_space<vmem>>) attributes {dimension_semantics = [#tpu.dimension_semantics<arbitrary>], iteration_bounds = array<i64: 2>, scalar_prefetch = 0 : i64, scratch_operands = 1 : i64, tpu.core_type = #tpu.core_type<tc>, window_params = [{pipeline_mode = #tpu.pipeline_mode<synchronous>, transform_indices = @transform_0, window_bounds = array<i64: 16, 128>}, {pipeline_mode = #tpu.pipeline_mode<synchronous>, transform_indices = @transform_1, window_bounds = array<i64: 1, 16, 16>}, {transform_indices = @transform_2, window_bounds = array<i64: 1, 128, 384>}, {transform_indices = @transform_3, window_bounds = array<i64: 1, 128, 128>}, {transform_indices = @transform_4, window_bounds = array<i64: 1, 128, 256>}, {transform_indices = @transform_5, window_bounds = array<i64: 1, 256, 128>}, {transform_indices = @transform_6, window_bounds = array<i64: 1, 16, 384>}, {pipeline_mode = #tpu.pipeline_mode<synchronous>, transform_indices = @transform_7, window_bounds = array<i64: 2, 128>}]} {
    %c0 = arith.constant 0 : index
    %c0_0 = arith.constant 0 : index
    %c0_1 = arith.constant 0 : index
    %0 = vector.load %arg7[%c0, %c0_0, %c0_1] : memref<1x16x384xf32, #tpu.memory_space<vmem>>, vector<1x1x384xf32>
    %1 = vector.shape_cast %0 : vector<1x1x384xf32> to vector<1x384xf32>
    %c0_2 = arith.constant 0 : index
    %c1 = arith.constant 1 : index
    %c0_3 = arith.constant 0 : index
    %2 = vector.load %arg7[%c0_2, %c1, %c0_3] : memref<1x16x384xf32, #tpu.memory_space<vmem>>, vector<1x1x128xf32>
    %3 = vector.shape_cast %2 : vector<1x1x128xf32> to vector<1x128xf32>
    %c0_4 = arith.constant 0 : index
    %c2 = arith.constant 2 : index
    %c0_5 = arith.constant 0 : index
    %4 = vector.load %arg7[%c0_4, %c2, %c0_5] : memref<1x16x384xf32, #tpu.memory_space<vmem>>, vector<1x1x256xf32>
    %5 = vector.shape_cast %4 : vector<1x1x256xf32> to vector<1x256xf32>
    %c0_6 = arith.constant 0 : index
    %c3 = arith.constant 3 : index
    %c0_7 = arith.constant 0 : index
    %6 = vector.load %arg7[%c0_6, %c3, %c0_7] : memref<1x16x384xf32, #tpu.memory_space<vmem>>, vector<1x1x128xf32>
    %7 = vector.shape_cast %6 : vector<1x1x128xf32> to vector<1x128xf32>
    %c0_8 = arith.constant 0 : index
    %c4 = arith.constant 4 : index
    %c0_9 = arith.constant 0 : index
    %8 = vector.load %arg7[%c0_8, %c4, %c0_9] : memref<1x16x384xf32, #tpu.memory_space<vmem>>, vector<1x1x128xf32>
    %9 = vector.shape_cast %8 : vector<1x1x128xf32> to vector<1x128xf32>
    %c0_10 = arith.constant 0 : index
    %c5 = arith.constant 5 : index
    %c0_11 = arith.constant 0 : index
    %10 = vector.load %arg7[%c0_10, %c5, %c0_11] : memref<1x16x384xf32, #tpu.memory_space<vmem>>, vector<1x1x128xf32>
    %11 = vector.shape_cast %10 : vector<1x1x128xf32> to vector<1x128xf32>
    %c0_12 = arith.constant 0 : index
    %c6 = arith.constant 6 : index
    %c0_13 = arith.constant 0 : index
    %12 = vector.load %arg7[%c0_12, %c6, %c0_13] : memref<1x16x384xf32, #tpu.memory_space<vmem>>, vector<1x1x128xf32>
    %13 = vector.shape_cast %12 : vector<1x1x128xf32> to vector<1x128xf32>
    %c0_14 = arith.constant 0 : index
    %c7 = arith.constant 7 : index
    %c0_15 = arith.constant 0 : index
    %14 = vector.load %arg7[%c0_14, %c7, %c0_15] : memref<1x16x384xf32, #tpu.memory_space<vmem>>, vector<1x1x128xf32>
    %15 = vector.shape_cast %14 : vector<1x1x128xf32> to vector<1x128xf32>
    %c0_16 = arith.constant 0 : index
    %c8 = arith.constant 8 : index
    %c0_17 = arith.constant 0 : index
    %16 = vector.load %arg7[%c0_16, %c8, %c0_17] : memref<1x16x384xf32, #tpu.memory_space<vmem>>, vector<1x1x128xf32>
    %17 = vector.shape_cast %16 : vector<1x1x128xf32> to vector<1x128xf32>
    %c0_18 = arith.constant 0 : index
    %c9 = arith.constant 9 : index
    %c0_19 = arith.constant 0 : index
    %18 = vector.load %arg7[%c0_18, %c9, %c0_19] : memref<1x16x384xf32, #tpu.memory_space<vmem>>, vector<1x1x128xf32>
    %19 = vector.shape_cast %18 : vector<1x1x128xf32> to vector<1x128xf32>
    %c0_i32 = arith.constant 0 : i32
    %20 = arith.cmpi eq, %arg0, %c0_i32 : i32
    %21 = arith.extui %20 : i1 to i32
    %c0_i32_20 = arith.constant 0 : i32
    %22 = arith.cmpi ne, %21, %c0_i32_20 : i32
    scf.if %22 {
      %c0_74 = arith.constant 0 : index
      %c0_75 = arith.constant 0 : index
      %193 = vector.load %arg1[%c0_74, %c0_75] : memref<16x128xf32, #tpu.memory_space<vmem>>, vector<16x128xf32>
      %cst_76 = arith.constant dense<0.000000e+00> : vector<16xf32>
      %194 = vector.multi_reduction <add>, %193, %cst_76 [1] : vector<16x128xf32> to vector<16xf32>
      %195 = vector.shape_cast %194 : vector<16xf32> to vector<16x1xf32>
      %cst_77 = arith.constant 1.280000e+02 : f32
      %196 = vector.broadcast %cst_77 : f32 to vector<16x1xf32>
      %197 = arith.divf %195, %196 : vector<16x1xf32>
      %198 = vector.broadcast %197 : vector<16x1xf32> to vector<16x128xf32>
      %199 = arith.subf %193, %198 : vector<16x128xf32>
      %200 = arith.mulf %199, %199 : vector<16x128xf32>
      %cst_78 = arith.constant dense<0.000000e+00> : vector<16xf32>
      %201 = vector.multi_reduction <add>, %200, %cst_78 [1] : vector<16x128xf32> to vector<16xf32>
      %202 = vector.shape_cast %201 : vector<16xf32> to vector<16x1xf32>
      %cst_79 = arith.constant 1.280000e+02 : f32
      %203 = vector.broadcast %cst_79 : f32 to vector<16x1xf32>
      %204 = arith.divf %202, %203 : vector<16x1xf32>
      %cst_80 = arith.constant 9.99999996E-13 : f32
      %205 = vector.broadcast %cst_80 : f32 to vector<16x1xf32>
      %206 = arith.addf %204, %205 : vector<16x1xf32>
      %207 = math.rsqrt %206 : vector<16x1xf32>
      %208 = vector.broadcast %207 : vector<16x1xf32> to vector<16x128xf32>
      %209 = arith.mulf %199, %208 : vector<16x128xf32>
      %210 = vector.broadcast %17 : vector<1x128xf32> to vector<16x128xf32>
      %211 = arith.mulf %209, %210 : vector<16x128xf32>
      %212 = vector.broadcast %19 : vector<1x128xf32> to vector<16x128xf32>
      %213 = arith.addf %211, %212 : vector<16x128xf32>
      %c0_81 = arith.constant 0 : index
      %c0_82 = arith.constant 0 : index
      %214 = vector.load %arg9[%c0_81, %c0_82] : memref<16x128xf32, #tpu.memory_space<vmem>>, vector<16x128xf32>
      tpu.vector_store %arg9[%c0_81, %c0_82], %213 {strides = array<i32>} : memref<16x128xf32, #tpu.memory_space<vmem>>, vector<16x128xf32>,
    } else {
    }
    %c0_21 = arith.constant 0 : index
    %c0_22 = arith.constant 0 : index
    %23 = vector.load %arg9[%c0_21, %c0_22] : memref<16x128xf32, #tpu.memory_space<vmem>>, vector<16x128xf32>
    %24 = arith.truncf %23 : vector<16x128xf32> to vector<16x128xbf16>
    %c0_23 = arith.constant 0 : index
    %c0_24 = arith.constant 0 : index
    %c0_25 = arith.constant 0 : index
    %25 = vector.load %arg3[%c0_23, %c0_24, %c0_25] : memref<1x128x384xbf16, #tpu.memory_space<vmem>>, vector<1x128x384xbf16>
    %26 = vector.shape_cast %25 : vector<1x128x384xbf16> to vector<128x384xbf16>
    %cst = arith.constant dense<0.000000e+00> : vector<16x384xf32>
    %27 = tpu.matmul %24, %26, %cst {dimension_numbers = #tpu.dot_dimension_numbers<[1], [0], [0], [1], [0, 0, 1, 1], [], []>} : vector<16x128xbf16>, vector<128x384xbf16>, vector<16x384xf32> -> vector<16x384xf32>
    %28 = vector.broadcast %1 : vector<1x384xf32> to vector<16x384xf32>
    %29 = arith.addf %27, %28 : vector<16x384xf32>
    %30 = vector.extract_strided_slice %29 {offsets = [0, 0], sizes = [16, 128], strides = [1, 1]} : vector<16x384xf32> to vector<16x128xf32>
    %31 = vector.extract_strided_slice %29 {offsets = [0, 128], sizes = [16, 128], strides = [1, 1]} : vector<16x384xf32> to vector<16x128xf32>
    %32 = vector.extract_strided_slice %29 {offsets = [0, 256], sizes = [16, 128], strides = [1, 1]} : vector<16x384xf32> to vector<16x128xf32>
    %33 = vector.extract_strided_slice %30 {offsets = [0, 0], sizes = [16, 32], strides = [1, 1]} : vector<16x128xf32> to vector<16x32xf32>
    %34 = vector.extract_strided_slice %30 {offsets = [0, 32], sizes = [16, 32], strides = [1, 1]} : vector<16x128xf32> to vector<16x32xf32>
    %35 = vector.extract_strided_slice %30 {offsets = [0, 64], sizes = [16, 32], strides = [1, 1]} : vector<16x128xf32> to vector<16x32xf32>
    %36 = vector.extract_strided_slice %30 {offsets = [0, 96], sizes = [16, 32], strides = [1, 1]} : vector<16x128xf32> to vector<16x32xf32>
    %37 = vector.shape_cast %33 : vector<16x32xf32> to vector<1x16x32xf32>
    %38 = vector.shape_cast %34 : vector<16x32xf32> to vector<1x16x32xf32>
    %39 = vector.shape_cast %35 : vector<16x32xf32> to vector<1x16x32xf32>
    %40 = vector.shape_cast %36 : vector<16x32xf32> to vector<1x16x32xf32>
    %41 = tpu.concatenate %37, %38, %39, %40 in 0 : vector<1x16x32xf32>, vector<1x16x32xf32>, vector<1x16x32xf32>, vector<1x16x32xf32> -> vector<4x16x32xf32>
    %42 = arith.truncf %41 : vector<4x16x32xf32> to vector<4x16x32xbf16>
    %43 = vector.extract_strided_slice %31 {offsets = [0, 0], sizes = [16, 32], strides = [1, 1]} : vector<16x128xf32> to vector<16x32xf32>
    %44 = vector.extract_strided_slice %31 {offsets = [0, 32], sizes = [16, 32], strides = [1, 1]} : vector<16x128xf32> to vector<16x32xf32>
    %45 = vector.extract_strided_slice %31 {offsets = [0, 64], sizes = [16, 32], strides = [1, 1]} : vector<16x128xf32> to vector<16x32xf32>
    %46 = vector.extract_strided_slice %31 {offsets = [0, 96], sizes = [16, 32], strides = [1, 1]} : vector<16x128xf32> to vector<16x32xf32>
    %47 = vector.shape_cast %43 : vector<16x32xf32> to vector<1x16x32xf32>
    %48 = vector.shape_cast %44 : vector<16x32xf32> to vector<1x16x32xf32>
    %49 = vector.shape_cast %45 : vector<16x32xf32> to vector<1x16x32xf32>
    %50 = vector.shape_cast %46 : vector<16x32xf32> to vector<1x16x32xf32>
    %51 = tpu.concatenate %47, %48, %49, %50 in 0 : vector<1x16x32xf32>, vector<1x16x32xf32>, vector<1x16x32xf32>, vector<1x16x32xf32> -> vector<4x16x32xf32>
    %52 = arith.truncf %51 : vector<4x16x32xf32> to vector<4x16x32xbf16>
    %53 = vector.extract_strided_slice %32 {offsets = [0, 0], sizes = [16, 32], strides = [1, 1]} : vector<16x128xf32> to vector<16x32xf32>
    %54 = vector.extract_strided_slice %32 {offsets = [0, 32], sizes = [16, 32], strides = [1, 1]} : vector<16x128xf32> to vector<16x32xf32>
    %55 = vector.extract_strided_slice %32 {offsets = [0, 64], sizes = [16, 32], strides = [1, 1]} : vector<16x128xf32> to vector<16x32xf32>
    %56 = vector.extract_strided_slice %32 {offsets = [0, 96], sizes = [16, 32], strides = [1, 1]} : vector<16x128xf32> to vector<16x32xf32>
    %57 = vector.shape_cast %53 : vector<16x32xf32> to vector<1x16x32xf32>
    %58 = vector.shape_cast %54 : vector<16x32xf32> to vector<1x16x32xf32>
    %59 = vector.shape_cast %55 : vector<16x32xf32> to vector<1x16x32xf32>
    %60 = vector.shape_cast %56 : vector<16x32xf32> to vector<1x16x32xf32>
    %61 = tpu.concatenate %57, %58, %59, %60 in 0 : vector<1x16x32xf32>, vector<1x16x32xf32>, vector<1x16x32xf32>, vector<1x16x32xf32> -> vector<4x16x32xf32>
    %62 = arith.truncf %61 : vector<4x16x32xf32> to vector<4x16x32xbf16>
    "tpu.trace_start"() <{level = 10 : i32, message = "hqd,hkd->hqk"}> : () -> ()
    %cst_26 = arith.constant dense<0.000000e+00> : vector<4x16x16xf32>
    %63 = tpu.matmul %42, %52, %cst_26 {dimension_numbers = #tpu.dot_dimension_numbers<[2], [2], [1], [1], [0, 0, 0, 1, 1, 1], [0], [0]>} : vector<4x16x32xbf16>, vector<4x16x32xbf16>, vector<4x16x16xf32> -> vector<4x16x16xf32>
    "tpu.trace_stop"() : () -> ()
    %c0_27 = arith.constant 0 : index
    %c0_28 = arith.constant 0 : index
    %c0_29 = arith.constant 0 : index
    %64 = vector.load %arg2[%c0_27, %c0_28, %c0_29] : memref<1x16x16xf32, #tpu.memory_space<vmem>>, vector<1x16x16xf32>
    %65 = vector.broadcast %64 : vector<1x16x16xf32> to vector<4x16x16xf32>
    %66 = arith.addf %63, %65 : vector<4x16x16xf32>
    %cst_30 = arith.constant dense<0xFF800000> : vector<4x16xf32>
    %67 = vector.multi_reduction <maximumf>, %66, %cst_30 [2] : vector<4x16x16xf32> to vector<4x16xf32>
    %68 = vector.shape_cast %67 : vector<4x16xf32> to vector<4x16x1xf32>
    %69 = vector.broadcast %68 : vector<4x16x1xf32> to vector<4x16x16xf32>
    %70 = arith.subf %66, %69 : vector<4x16x16xf32>
    %71 = math.exp %70 : vector<4x16x16xf32>
    %cst_31 = arith.constant dense<0.000000e+00> : vector<4x16xf32>
    %72 = vector.multi_reduction <add>, %71, %cst_31 [2] : vector<4x16x16xf32> to vector<4x16xf32>
    %73 = vector.shape_cast %72 : vector<4x16xf32> to vector<4x16x1xf32>
    %74 = tpu.reciprocal %73 {approx = true} : vector<4x16x1xf32> -> vector<4x16x1xf32>
    %75 = vector.broadcast %74 : vector<4x16x1xf32> to vector<4x16x16xf32>
    %76 = arith.mulf %71, %75 : vector<4x16x16xf32>
    %77 = arith.truncf %76 : vector<4x16x16xf32> to vector<4x16x16xbf16>
    "tpu.trace_start"() <{level = 10 : i32, message = "hqk,hkd->hqd"}> : () -> ()
    %cst_32 = arith.constant dense<0.000000e+00> : vector<4x16x32xf32>
    %78 = tpu.matmul %77, %62, %cst_32 {dimension_numbers = #tpu.dot_dimension_numbers<[2], [1], [1], [2], [0, 0, 0, 1, 1, 2], [0], [0]>} : vector<4x16x16xbf16>, vector<4x16x32xbf16>, vector<4x16x32xf32> -> vector<4x16x32xf32>
    "tpu.trace_stop"() : () -> ()
    %79 = vector.extract_strided_slice %78 {offsets = [0, 0, 0], sizes = [1, 16, 32], strides = [1, 1, 1]} : vector<4x16x32xf32> to vector<1x16x32xf32>
    %80 = vector.shape_cast %79 : vector<1x16x32xf32> to vector<16x32xf32>
    %81 = vector.extract_strided_slice %78 {offsets = [1, 0, 0], sizes = [1, 16, 32], strides = [1, 1, 1]} : vector<4x16x32xf32> to vector<1x16x32xf32>
    %82 = vector.shape_cast %81 : vector<1x16x32xf32> to vector<16x32xf32>
    %83 = vector.extract_strided_slice %78 {offsets = [2, 0, 0], sizes = [1, 16, 32], strides = [1, 1, 1]} : vector<4x16x32xf32> to vector<1x16x32xf32>
    %84 = vector.shape_cast %83 : vector<1x16x32xf32> to vector<16x32xf32>
    %85 = vector.extract_strided_slice %78 {offsets = [3, 0, 0], sizes = [1, 16, 32], strides = [1, 1, 1]} : vector<4x16x32xf32> to vector<1x16x32xf32>
    %86 = vector.shape_cast %85 : vector<1x16x32xf32> to vector<16x32xf32>
    %87 = tpu.concatenate %80, %82, %84, %86 in 1 : vector<16x32xf32>, vector<16x32xf32>, vector<16x32xf32>, vector<16x32xf32> -> vector<16x128xf32>
    %88 = arith.truncf %87 : vector<16x128xf32> to vector<16x128xbf16>
    %c0_33 = arith.constant 0 : index
    %c0_34 = arith.constant 0 : index
    %c0_35 = arith.constant 0 : index
    %89 = vector.load %arg4[%c0_33, %c0_34, %c0_35] : memref<1x128x128xbf16, #tpu.memory_space<vmem>>, vector<1x128x128xbf16>
    %90 = vector.shape_cast %89 : vector<1x128x128xbf16> to vector<128x128xbf16>
    %cst_36 = arith.constant dense<0.000000e+00> : vector<16x128xf32>
    %91 = tpu.matmul %88, %90, %cst_36 {dimension_numbers = #tpu.dot_dimension_numbers<[1], [0], [0], [1], [0, 0, 1, 1], [], []>} : vector<16x128xbf16>, vector<128x128xbf16>, vector<16x128xf32> -> vector<16x128xf32>
    %92 = vector.broadcast %3 : vector<1x128xf32> to vector<16x128xf32>
    %93 = arith.addf %91, %92 : vector<16x128xf32>
    %94 = arith.addf %93, %23 : vector<16x128xf32>
    %cst_37 = arith.constant dense<0.000000e+00> : vector<16xf32>
    %95 = vector.multi_reduction <add>, %94, %cst_37 [1] : vector<16x128xf32> to vector<16xf32>
    %96 = vector.shape_cast %95 : vector<16xf32> to vector<16x1xf32>
    %cst_38 = arith.constant 1.280000e+02 : f32
    %97 = vector.broadcast %cst_38 : f32 to vector<16x1xf32>
    %98 = arith.divf %96, %97 : vector<16x1xf32>
    %99 = vector.broadcast %98 : vector<16x1xf32> to vector<16x128xf32>
    %100 = arith.subf %94, %99 : vector<16x128xf32>
    %101 = arith.mulf %100, %100 : vector<16x128xf32>
    %cst_39 = arith.constant dense<0.000000e+00> : vector<16xf32>
    %102 = vector.multi_reduction <add>, %101, %cst_39 [1] : vector<16x128xf32> to vector<16xf32>
    %103 = vector.shape_cast %102 : vector<16xf32> to vector<16x1xf32>
    %cst_40 = arith.constant 1.280000e+02 : f32
    %104 = vector.broadcast %cst_40 : f32 to vector<16x1xf32>
    %105 = arith.divf %103, %104 : vector<16x1xf32>
    %cst_41 = arith.constant 9.99999996E-13 : f32
    %106 = vector.broadcast %cst_41 : f32 to vector<16x1xf32>
    %107 = arith.addf %105, %106 : vector<16x1xf32>
    %108 = math.rsqrt %107 : vector<16x1xf32>
    %109 = vector.broadcast %108 : vector<16x1xf32> to vector<16x128xf32>
    %110 = arith.mulf %100, %109 : vector<16x128xf32>
    %111 = vector.broadcast %9 : vector<1x128xf32> to vector<16x128xf32>
    %112 = arith.mulf %110, %111 : vector<16x128xf32>
    %113 = vector.broadcast %11 : vector<1x128xf32> to vector<16x128xf32>
    %114 = arith.addf %112, %113 : vector<16x128xf32>
    %115 = arith.truncf %114 : vector<16x128xf32> to vector<16x128xbf16>
    %c0_42 = arith.constant 0 : index
    %c0_43 = arith.constant 0 : index
    %c0_44 = arith.constant 0 : index
    %116 = vector.load %arg5[%c0_42, %c0_43, %c0_44] : memref<1x128x256xbf16, #tpu.memory_space<vmem>>, vector<1x128x256xbf16>
    %117 = vector.shape_cast %116 : vector<1x128x256xbf16> to vector<128x256xbf16>
    %cst_45 = arith.constant dense<0.000000e+00> : vector<16x256xf32>
    %118 = tpu.matmul %115, %117, %cst_45 {dimension_numbers = #tpu.dot_dimension_numbers<[1], [0], [0], [1], [0, 0, 1, 1], [], []>} : vector<16x128xbf16>, vector<128x256xbf16>, vector<16x256xf32> -> vector<16x256xf32>
    %119 = vector.broadcast %5 : vector<1x256xf32> to vector<16x256xf32>
    %120 = arith.addf %118, %119 : vector<16x256xf32>
    %cst_46 = arith.constant 5.000000e-01 : f32
    %121 = vector.broadcast %cst_46 : f32 to vector<16x256xf32>
    %122 = arith.mulf %121, %120 : vector<16x256xf32>
    %cst_47 = arith.constant 0.707106769 : f32
    %123 = vector.broadcast %cst_47 : f32 to vector<16x256xf32>
    %124 = arith.mulf %120, %123 : vector<16x256xf32>
    %cst_48 = arith.constant 0.000000e+00 : f32
    %125 = vector.broadcast %cst_48 : f32 to vector<16x256xf32>
    %126 = arith.cmpf oge, %124, %125 : vector<16x256xf32>
    %cst_49 = arith.constant 1.000000e+00 : f32
    %cst_50 = arith.constant -1.000000e+00 : f32
    %127 = vector.broadcast %cst_49 : f32 to vector<16x256xf32>
    %128 = vector.broadcast %cst_50 : f32 to vector<16x256xf32>
    %129 = arith.select %126, %127, %128 : vector<16x256xi1>, vector<16x256xf32>
    %130 = math.absf %124 : vector<16x256xf32>
    %cst_51 = arith.constant 0.327591091 : f32
    %131 = vector.broadcast %cst_51 : f32 to vector<16x256xf32>
    %132 = arith.mulf %131, %130 : vector<16x256xf32>
    %cst_52 = arith.constant 1.000000e+00 : f32
    %133 = vector.broadcast %cst_52 : f32 to vector<16x256xf32>
    %134 = arith.addf %133, %132 : vector<16x256xf32>
    %cst_53 = arith.constant 1.000000e+00 : f32
    %135 = vector.broadcast %cst_53 : f32 to vector<16x256xf32>
    %136 = arith.divf %135, %134 : vector<16x256xf32>
    %cst_54 = arith.constant 1.06140542 : f32
    %137 = vector.broadcast %cst_54 : f32 to vector<16x256xf32>
    %138 = arith.mulf %137, %136 : vector<16x256xf32>
    %cst_55 = arith.constant -1.45315206 : f32
    %139 = vector.broadcast %cst_55 : f32 to vector<16x256xf32>
    %140 = arith.addf %138, %139 : vector<16x256xf32>
    %141 = arith.mulf %140, %136 : vector<16x256xf32>
    %cst_56 = arith.constant 1.42141378 : f32
    %142 = vector.broadcast %cst_56 : f32 to vector<16x256xf32>
    %143 = arith.addf %141, %142 : vector<16x256xf32>
    %144 = arith.mulf %143, %136 : vector<16x256xf32>
    %cst_57 = arith.constant -0.284496725 : f32
    %145 = vector.broadcast %cst_57 : f32 to vector<16x256xf32>
    %146 = arith.addf %144, %145 : vector<16x256xf32>
    %147 = arith.mulf %146, %136 : vector<16x256xf32>
    %cst_58 = arith.constant 0.254829586 : f32
    %148 = vector.broadcast %cst_58 : f32 to vector<16x256xf32>
    %149 = arith.addf %147, %148 : vector<16x256xf32>
    %150 = arith.mulf %149, %136 : vector<16x256xf32>
    %cst_59 = arith.constant 0.000000e+00 : f32
    %151 = vector.broadcast %cst_59 : f32 to vector<16x256xf32>
    %152 = arith.subf %151, %130 : vector<16x256xf32>
    %153 = arith.mulf %152, %130 : vector<16x256xf32>
    %154 = math.exp %153 : vector<16x256xf32>
    %155 = arith.mulf %150, %154 : vector<16x256xf32>
    %cst_60 = arith.constant 1.000000e+00 : f32
    %156 = vector.broadcast %cst_60 : f32 to vector<16x256xf32>
    %157 = arith.subf %156, %155 : vector<16x256xf32>
    %158 = arith.mulf %129, %157 : vector<16x256xf32>
    %cst_61 = arith.constant 1.000000e+00 : f32
    %159 = vector.broadcast %cst_61 : f32 to vector<16x256xf32>
    %160 = arith.addf %159, %158 : vector<16x256xf32>
    %161 = arith.mulf %122, %160 : vector<16x256xf32>
    %162 = arith.truncf %161 : vector<16x256xf32> to vector<16x256xbf16>
    %c0_62 = arith.constant 0 : index
    %c0_63 = arith.constant 0 : index
    %c0_64 = arith.constant 0 : index
    %163 = vector.load %arg6[%c0_62, %c0_63, %c0_64] : memref<1x256x128xbf16, #tpu.memory_space<vmem>>, vector<1x256x128xbf16>
    %164 = vector.shape_cast %163 : vector<1x256x128xbf16> to vector<256x128xbf16>
    %cst_65 = arith.constant dense<0.000000e+00> : vector<16x128xf32>
    %165 = tpu.matmul %162, %164, %cst_65 {dimension_numbers = #tpu.dot_dimension_numbers<[1], [0], [0], [1], [0, 0, 1, 1], [], []>} : vector<16x256xbf16>, vector<256x128xbf16>, vector<16x128xf32> -> vector<16x128xf32>
    %166 = vector.broadcast %7 : vector<1x128xf32> to vector<16x128xf32>
    %167 = arith.addf %165, %166 : vector<16x128xf32>
    %168 = arith.addf %167, %114 : vector<16x128xf32>
    %cst_66 = arith.constant dense<0.000000e+00> : vector<16xf32>
    %169 = vector.multi_reduction <add>, %168, %cst_66 [1] : vector<16x128xf32> to vector<16xf32>
    %170 = vector.shape_cast %169 : vector<16xf32> to vector<16x1xf32>
    %cst_67 = arith.constant 1.280000e+02 : f32
    %171 = vector.broadcast %cst_67 : f32 to vector<16x1xf32>
    %172 = arith.divf %170, %171 : vector<16x1xf32>
    %173 = vector.broadcast %172 : vector<16x1xf32> to vector<16x128xf32>
    %174 = arith.subf %168, %173 : vector<16x128xf32>
    %175 = arith.mulf %174, %174 : vector<16x128xf32>
    %cst_68 = arith.constant dense<0.000000e+00> : vector<16xf32>
    %176 = vector.multi_reduction <add>, %175, %cst_68 [1] : vector<16x128xf32> to vector<16xf32>
    %177 = vector.shape_cast %176 : vector<16xf32> to vector<16x1xf32>
    %cst_69 = arith.constant 1.280000e+02 : f32
    %178 = vector.broadcast %cst_69 : f32 to vector<16x1xf32>
    %179 = arith.divf %177, %178 : vector<16x1xf32>
    %cst_70 = arith.constant 9.99999996E-13 : f32
    %180 = vector.broadcast %cst_70 : f32 to vector<16x1xf32>
    %181 = arith.addf %179, %180 : vector<16x1xf32>
    %182 = math.rsqrt %181 : vector<16x1xf32>
    %183 = vector.broadcast %182 : vector<16x1xf32> to vector<16x128xf32>
    %184 = arith.mulf %174, %183 : vector<16x128xf32>
    %185 = vector.broadcast %13 : vector<1x128xf32> to vector<16x128xf32>
    %186 = arith.mulf %184, %185 : vector<16x128xf32>
    %187 = vector.broadcast %15 : vector<1x128xf32> to vector<16x128xf32>
    %188 = arith.addf %186, %187 : vector<16x128xf32>
    %c0_71 = arith.constant 0 : index
    %c0_72 = arith.constant 0 : index
    %189 = vector.load %arg9[%c0_71, %c0_72] : memref<16x128xf32, #tpu.memory_space<vmem>>, vector<16x128xf32>
    tpu.vector_store %arg9[%c0_71, %c0_72], %188 {strides = array<i32>} : memref<16x128xf32, #tpu.memory_space<vmem>>, vector<16x128xf32>,
    %c1_i32 = arith.constant 1 : i32
    %190 = arith.cmpi eq, %arg0, %c1_i32 : i32
    %191 = arith.extui %190 : i1 to i32
    %c0_i32_73 = arith.constant 0 : i32
    %192 = arith.cmpi ne, %191, %c0_i32_73 : i32
    scf.if %192 {
      %193 = vector.extract_strided_slice %188 {offsets = [0, 0], sizes = [1, 128], strides = [1, 1]} : vector<16x128xf32> to vector<1x128xf32>
      %194 = vector.extract_strided_slice %188 {offsets = [8, 0], sizes = [1, 128], strides = [1, 1]} : vector<16x128xf32> to vector<1x128xf32>
      %195 = tpu.concatenate %193, %194 in 0 : vector<1x128xf32>, vector<1x128xf32> -> vector<2x128xf32>
      %c0_74 = arith.constant 0 : index
      %c0_75 = arith.constant 0 : index
      %196 = vector.load %arg8[%c0_74, %c0_75] : memref<2x128xf32, #tpu.memory_space<vmem>>, vector<2x128xf32>
      tpu.vector_store %arg8[%c0_74, %c0_75], %195 {strides = array<i32>} : memref<2x128xf32, #tpu.memory_space<vmem>>, vector<2x128xf32>,
    } else {
    }
    return
  }
  func.func @transform_0(%arg0: i32) -> (i32, i32) {
    %c0_i32 = arith.constant 0 : i32
    %c0_i32_0 = arith.constant 0 : i32
    %c0_i32_1 = arith.constant 0 : i32
    return %c0_i32, %c0_i32_0 : i32, i32
  }
  func.func @transform_1(%arg0: i32) -> (i32, i32, i32) {
    %c0_i32 = arith.constant 0 : i32
    %c0_i32_0 = arith.constant 0 : i32
    %c0_i32_1 = arith.constant 0 : i32
    %c0_i32_2 = arith.constant 0 : i32
    return %c0_i32, %c0_i32_0, %c0_i32_1 : i32, i32, i32
  }
  func.func @transform_2(%arg0: i32) -> (i32, i32, i32) {
    %c0_i32 = arith.constant 0 : i32
    %c0_i32_0 = arith.constant 0 : i32
    %c0_i32_1 = arith.constant 0 : i32
    return %arg0, %c0_i32, %c0_i32_0 : i32, i32, i32
  }
  func.func @transform_3(%arg0: i32) -> (i32, i32, i32) {
    %c0_i32 = arith.constant 0 : i32
    %c0_i32_0 = arith.constant 0 : i32
    %c0_i32_1 = arith.constant 0 : i32
    return %arg0, %c0_i32, %c0_i32_0 : i32, i32, i32
  }
  func.func @transform_4(%arg0: i32) -> (i32, i32, i32) {
    %c0_i32 = arith.constant 0 : i32
    %c0_i32_0 = arith.constant 0 : i32
    %c0_i32_1 = arith.constant 0 : i32
    return %arg0, %c0_i32, %c0_i32_0 : i32, i32, i32
  }
  func.func @transform_5(%arg0: i32) -> (i32, i32, i32) {
    %c0_i32 = arith.constant 0 : i32
    %c0_i32_0 = arith.constant 0 : i32
    %c0_i32_1 = arith.constant 0 : i32
    return %arg0, %c0_i32, %c0_i32_0 : i32, i32, i32
  }
  func.func @transform_6(%arg0: i32) -> (i32, i32, i32) {
    %c0_i32 = arith.constant 0 : i32
    %c0_i32_0 = arith.constant 0 : i32
    %c0_i32_1 = arith.constant 0 : i32
    return %arg0, %c0_i32, %c0_i32_0 : i32, i32, i32
  }
  func.func @transform_7(%arg0: i32) -> (i32, i32) {
    %c0_i32 = arith.constant 0 : i32
    %c0_i32_0 = arith.constant 0 : i32
    %c0_i32_1 = arith.constant 0 : i32
    return %c0_i32, %c0_i32_0 : i32, i32
  }
}

</mosaic_0001>

<llo_original>
// kernel: tpu_custom_call.1
$region0: #{tpu_custom_call.1}
  #allocation0 [shape = 'u32[]', space=smem, size = 0x4, offset = 0x4, fixed_abs, tag = 'smem constant byte address 0x4 - core index']
  #allocation1 [shape = 'u32[72,128]{1,0:T(1,128)}', space=vmem, size = 0x9000, scoped, tag = 'internal scratch']
  #allocation2 [shape = 'f32[16,128]{1,0:T(8,128)}', space=vmem, size = 0x2000, scoped, tag = 'scratch operand']
  %s0 = inlined_call_operand.hbm [shape: f32[16,128], index: 0, kind: input, shape index: {}]
  %s1 = inlined_call_operand.hbm [shape: f32[1,16,16], index: 1, kind: input, shape index: {}]
  %s2 = inlined_call_operand.hbm [shape: bf16[2,128,384], index: 2, kind: input, shape index: {}]
  %s3 = inlined_call_operand.hbm [shape: bf16[2,128,128], index: 3, kind: input, shape index: {}]
  %s4 = inlined_call_operand.hbm [shape: bf16[2,128,256], index: 4, kind: input, shape index: {}]
  %s5 = inlined_call_operand.hbm [shape: bf16[2,256,128], index: 5, kind: input, shape index: {}]
  %s6 = inlined_call_operand.hbm [shape: f32[2,16,384], index: 6, kind: input, shape index: {}]
  %s7 = inlined_call_operand.hbm [shape: f32[2,128], index: 7, kind: output, shape index: {}]
  %s8 = sld [smem:[#allocation0]]
  $region97: #{tpu_custom_call.1} parent=0
    _
  %s10 = ssub.s32 1, %s8
  %s11 = scalar_select 0, %s10, %s8
  $region1: #{tpu_custom_call.1} parent=0
    #allocation3 [shape = 'u8[8192]{0}', space=vmem, size = 0x2000, scoped, tag = 'input window, operand 0, single buffered']
    #allocation4 [shape = 's32[2]{0}', space=sflag, size = 0x8, scoped, tag = 'scoped memory for tpu_custom_call.1']
    #allocation5 [shape = 's32[2]{0}', space=sflag, size = 0x8, scoped, tag = 'scoped memory for tpu_custom_call.1']
    #allocation6 [shape = 'u8[8192]{0}', space=vmem, size = 0x2000, scoped, tag = 'input window, operand 1, single buffered']
    #allocation7 [shape = 's32[1]{0}', space=sflag, size = 0x4, scoped, tag = 'scoped memory for tpu_custom_call.1']
    #allocation8 [shape = 'u8[196608]{0}', space=vmem, size = 0x30000, scoped, tag = 'input window, operand 2']
    #allocation9 [shape = 'u8[65536]{0}', space=vmem, size = 0x10000, scoped, tag = 'input window, operand 3']
    #allocation10 [shape = 'u8[131072]{0}', space=vmem, size = 0x20000, scoped, tag = 'input window, operand 4']
    #allocation11 [shape = 'u8[131072]{0}', space=vmem, size = 0x20000, scoped, tag = 'input window, operand 5']
    #allocation12 [shape = 'u8[49152]{0}', space=vmem, size = 0xc000, scoped, tag = 'input window, operand 6']
    #allocation13 [shape = 'u8[1024]{0}', space=vmem, size = 0x400, scoped, tag = 'output window, operand 0, single buffered']
    %12 = vsyncpa [#allocation4], 0
    %13 = vsyncpa [#allocation7], 0
    %14 = vsyncpa [#allocation5], 0
    loop: start=0, step=1, limit=4
    $region2: #{tpu_custom_call.1} parent=1 // loop_pre_header
      _
    $region3: #{tpu_custom_call.1} parent=1 // loop_header
      %s16 = sphi 0, %s20
      %p17 = scmp.ge.s32.totalorder %s16, 4
      %s24 = sphi 0, %s24
      %s26 = sphi 0, %s24
      %s27 = sphi 0, %s26
      %s41 = sphi 0, %s27
      %s45 = sphi 0, %s45
      %s47 = sphi 0, %s45
      %s48 = sphi 0, %s47
      %s62 = sphi 0, %s48
      %s68 = sphi 0, %s70
      %s71 = sphi 0, %s68
      %s72 = sphi 0, %s71
      %s88 = sphi 0, %s72
      %s94 = sphi 0, %s96
      %s97 = sphi 0, %s94
      %s98 = sphi 0, %s97
      %s114 = sphi 0, %s98
      %s120 = sphi 0, %s122
      %s123 = sphi 0, %s120
      %s124 = sphi 0, %s123
      %s140 = sphi 0, %s124
      %s146 = sphi 0, %s148
      %s149 = sphi 0, %s146
      %s150 = sphi 0, %s149
      %s166 = sphi 0, %s150
      %s172 = sphi 0, %s174
      %s175 = sphi 0, %s172
      %s176 = sphi 0, %s175
      %s192 = sphi 0, %s176
      %s196 = sphi 0, %s196
      %s198 = sphi 0, %s196
      %s199 = sphi 0, %s198
      %s213 = sphi 0, %s199
    $region4: #{tpu_custom_call.1} parent=1 // loop_header_branch
      %19 = sbr.rel (%p17) target = $region8
    $region5: #{tpu_custom_call.1} parent=1 // loop_body
      %s21 = ssub.s32 %s16, 1
      %s22 = ssub.s32 %s16, 2
      %s23 = sadd.s32 %s16, 1
      %s25 = sadd.s32 %s24, 1
      %p28 = scmp.eq.s32.totalorder %s16, 1
      %p29 = scmp.ne.s32.totalorder %s24, %s26
      %p30 = scmp.eq.s32.totalorder %s16, 0
      %p31 = por %p29, %p30
      %p32 = scmp.ne.s32.totalorder %s24, %s26
      %p33 = scmp.eq.s32.totalorder %s21, 1
      %p34 = por %p32, %p33
      %p35 = scmp.ne.s32.totalorder %s26, %s27
      %p36 = scmp.eq.s32.totalorder %s21, 0
      %p37 = por %p35, %p36
      %p38 = scmp.ne.s32.totalorder %s26, %s27
      %p39 = scmp.eq.s32.totalorder %s22, 1
      %p40 = por %p38, %p39
      %p42 = scmp.ne.s32.totalorder %s27, %s41
      %p43 = scmp.eq.s32.totalorder %s22, 0
      %p44 = por %p42, %p43
      %s46 = sadd.s32 %s45, 1
      %p49 = scmp.eq.s32.totalorder %s16, 1
      %p50 = scmp.ne.s32.totalorder %s45, %s47
      %p51 = scmp.eq.s32.totalorder %s16, 0
      %p52 = por %p50, %p51
      %p53 = scmp.ne.s32.totalorder %s45, %s47
      %p54 = scmp.eq.s32.totalorder %s21, 1
      %p55 = por %p53, %p54
      %p56 = scmp.ne.s32.totalorder %s47, %s48
      %p57 = scmp.eq.s32.totalorder %s21, 0
      %p58 = por %p56, %p57
      %p59 = scmp.ne.s32.totalorder %s47, %s48
      %p60 = scmp.eq.s32.totalorder %s22, 1
      %p61 = por %p59, %p60
      %p63 = scmp.ne.s32.totalorder %s48, %s62
      %p64 = scmp.eq.s32.totalorder %s22, 0
      %p65 = por %p63, %p64
      %s66 = ssub.s32 %s16, %s23
      %p67 = scmp.eq.s32.totalorder %s66, 0
      %s69 = sadd.s32 %s68, 1
      %s70 = scalar_select %p67, %s68, %s69
      %p73 = pneg %p67
      %p74 = scmp.eq.s32.totalorder %s16, 1
      %p75 = por %p73, %p74
      %p76 = scmp.ne.s32.totalorder %s68, %s71
      %p77 = scmp.eq.s32.totalorder %s16, 0
      %p78 = por %p76, %p77
      %p79 = scmp.ne.s32.totalorder %s68, %s71
      %p80 = scmp.eq.s32.totalorder %s21, 1
      %p81 = por %p79, %p80
      %p82 = scmp.ne.s32.totalorder %s71, %s72
      %p83 = scmp.eq.s32.totalorder %s21, 0
      %p84 = por %p82, %p83
      %p85 = scmp.ne.s32.totalorder %s71, %s72
      %p86 = scmp.eq.s32.totalorder %s22, 1
      %p87 = por %p85, %p86
      %p89 = scmp.ne.s32.totalorder %s72, %s88
      %p90 = scmp.eq.s32.totalorder %s22, 0
      %p91 = por %p89, %p90
      %s92 = ssub.s32 %s16, %s23
      %p93 = scmp.eq.s32.totalorder %s92, 0
      %s95 = sadd.s32 %s94, 1
      %s96 = scalar_select %p93, %s94, %s95
      %p99 = pneg %p93
      %p100 = scmp.eq.s32.totalorder %s16, 1
      %p101 = por %p99, %p100
      %p102 = scmp.ne.s32.totalorder %s94, %s97
      %p103 = scmp.eq.s32.totalorder %s16, 0
      %p104 = por %p102, %p103
      %p105 = scmp.ne.s32.totalorder %s94, %s97
      %p106 = scmp.eq.s32.totalorder %s21, 1
      %p107 = por %p105, %p106
      %p108 = scmp.ne.s32.totalorder %s97, %s98
      %p109 = scmp.eq.s32.totalorder %s21, 0
      %p110 = por %p108, %p109
      %p111 = scmp.ne.s32.totalorder %s97, %s98
      %p112 = scmp.eq.s32.totalorder %s22, 1
      %p113 = por %p111, %p112
      %p115 = scmp.ne.s32.totalorder %s98, %s114
      %p116 = scmp.eq.s32.totalorder %s22, 0
      %p117 = por %p115, %p116
      %s118 = ssub.s32 %s16, %s23
      %p119 = scmp.eq.s32.totalorder %s118, 0
      %s121 = sadd.s32 %s120, 1
      %s122 = scalar_select %p119, %s120, %s121
      %p125 = pneg %p119
      %p126 = scmp.eq.s32.totalorder %s16, 1
      %p127 = por %p125, %p126
      %p128 = scmp.ne.s32.totalorder %s120, %s123
      %p129 = scmp.eq.s32.totalorder %s16, 0
      %p130 = por %p128, %p129
      %p131 = scmp.ne.s32.totalorder %s120, %s123
      %p132 = scmp.eq.s32.totalorder %s21, 1
      %p133 = por %p131, %p132
      %p134 = scmp.ne.s32.totalorder %s123, %s124
      %p135 = scmp.eq.s32.totalorder %s21, 0
      %p136 = por %p134, %p135
      %p137 = scmp.ne.s32.totalorder %s123, %s124
      %p138 = scmp.eq.s32.totalorder %s22, 1
      %p139 = por %p137, %p138
      %p141 = scmp.ne.s32.totalorder %s124, %s140
      %p142 = scmp.eq.s32.totalorder %s22, 0
      %p143 = por %p141, %p142
      %s144 = ssub.s32 %s16, %s23
      %p145 = scmp.eq.s32.totalorder %s144, 0
      %s147 = sadd.s32 %s146, 1
      %s148 = scalar_select %p145, %s146, %s147
      %p151 = pneg %p145
      %p152 = scmp.eq.s32.totalorder %s16, 1
      %p153 = por %p151, %p152
      %p154 = scmp.ne.s32.totalorder %s146, %s149
      %p155 = scmp.eq.s32.totalorder %s16, 0
      %p156 = por %p154, %p155
      %p157 = scmp.ne.s32.totalorder %s146, %s149
      %p158 = scmp.eq.s32.totalorder %s21, 1
      %p159 = por %p157, %p158
      %p160 = scmp.ne.s32.totalorder %s149, %s150
      %p161 = scmp.eq.s32.totalorder %s21, 0
      %p162 = por %p160, %p161
      %p163 = scmp.ne.s32.totalorder %s149, %s150
      %p164 = scmp.eq.s32.totalorder %s22, 1
      %p165 = por %p163, %p164
      %p167 = scmp.ne.s32.totalorder %s150, %s166
      %p168 = scmp.eq.s32.totalorder %s22, 0
      %p169 = por %p167, %p168
      %s170 = ssub.s32 %s16, %s23
      %p171 = scmp.eq.s32.totalorder %s170, 0
      %s173 = sadd.s32 %s172, 1
      %s174 = scalar_select %p171, %s172, %s173
      %p177 = pneg %p171
      %p178 = scmp.eq.s32.totalorder %s16, 1
      %p179 = por %p177, %p178
      %p180 = scmp.ne.s32.totalorder %s172, %s175
      %p181 = scmp.eq.s32.totalorder %s16, 0
      %p182 = por %p180, %p181
      %p183 = scmp.ne.s32.totalorder %s172, %s175
      %p184 = scmp.eq.s32.totalorder %s21, 1
      %p185 = por %p183, %p184
      %p186 = scmp.ne.s32.totalorder %s175, %s176
      %p187 = scmp.eq.s32.totalorder %s21, 0
      %p188 = por %p186, %p187
      %p189 = scmp.ne.s32.totalorder %s175, %s176
      %p190 = scmp.eq.s32.totalorder %s22, 1
      %p191 = por %p189, %p190
      %p193 = scmp.ne.s32.totalorder %s176, %s192
      %p194 = scmp.eq.s32.totalorder %s22, 0
      %p195 = por %p193, %p194
      %s197 = sadd.s32 %s196, 1
      %p200 = scmp.eq.s32.totalorder %s16, 1
      %p201 = scmp.ne.s32.totalorder %s196, %s198
      %p202 = scmp.eq.s32.totalorder %s16, 0
      %p203 = por %p201, %p202
      %p204 = scmp.ne.s32.totalorder %s196, %s198
      %p205 = scmp.eq.s32.totalorder %s21, 1
      %p206 = por %p204, %p205
      %p207 = scmp.ne.s32.totalorder %s198, %s199
      %p208 = scmp.eq.s32.totalorder %s21, 0
      %p209 = por %p207, %p208
      %p210 = scmp.ne.s32.totalorder %s198, %s199
      %p211 = scmp.eq.s32.totalorder %s22, 1
      %p212 = por %p210, %p211
      %p214 = scmp.ne.s32.totalorder %s199, %s213
      %p215 = scmp.eq.s32.totalorder %s22, 0
      %p216 = por %p214, %p215
      %p217 = scmp.le.s32.totalorder 1, %s16
      %p218 = scmp.lt.s32.totalorder %s16, 3
      %p219 = pnand %p217, %p218
      %p220 = pneg %p219
      // Predicated region
      $region9: #{tpu_custom_call.1} parent=5 // pred_check
        _
      $region10: #{tpu_custom_call.1} parent=5 // pred_check_branch
        %222 = sbr.rel (%p219) target = $region12
      $region11: #{tpu_custom_call.1} parent=5 // pred_region
        %s223 = ssub.s32 %s16, 1
        // Predicated region
        $region13: #{tpu_custom_call.1} parent=11 // pred_check
          %p224 = pneg %p37
        $region14: #{tpu_custom_call.1} parent=11 // pred_check_branch
          %226 = sbr.rel (%p224) target = $region16
        $region15: #{tpu_custom_call.1} parent=11 // pred_region
          %228 = vsyncadd [#allocation4], 0
          %s229 = sshll.u32 %s0, 4
          %s230 = int_to_ptr.hbm [resolvable:$true] %s229
          %s231 = sshll.u32 [#allocation3], 4
          %s232 = int_to_ptr.vmem [resolvable:$true] %s231
          %237 = dma.hbm_to_vmem [thread:$0]  %s230, 256, %s232, [#allocation4], 128, 128, 8
        $region16: #{tpu_custom_call.1} parent=11 // pred_fallthru
          _
        // Predicated region
        $region17: #{tpu_custom_call.1} parent=11 // pred_check
          %p238 = pneg %p58
        $region18: #{tpu_custom_call.1} parent=11 // pred_check_branch
          %240 = sbr.rel (%p238) target = $region20
        $region19: #{tpu_custom_call.1} parent=11 // pred_region
          %242 = vsyncadd [#allocation7], 0
          %s243 = sshll.u32 %s1, 4
          %s244 = int_to_ptr.hbm [resolvable:$true] %s243
          %s245 = sshll.u32 [#allocation6], 4
          %s246 = int_to_ptr.vmem [resolvable:$true] %s245
          %251 = dma.hbm_to_vmem [thread:$0]  %s244, 256, %s246, [#allocation7], 128, 128, 8
        $region20: #{tpu_custom_call.1} parent=11 // pred_fallthru
          _
      $region12: #{tpu_custom_call.1} parent=5 // pred_fallthru
        _
      %p252 = scmp.lt.s32.totalorder %s16, 2
      // Predicated region
      $region21: #{tpu_custom_call.1} parent=5 // pred_check
        %p253 = pneg %p252
      $region22: #{tpu_custom_call.1} parent=5 // pred_check_branch
        %255 = sbr.rel (%p253) target = $region24
      $region23: #{tpu_custom_call.1} parent=5 // pred_region
        // Predicated region
        $region25: #{tpu_custom_call.1} parent=23 // pred_check
          %p256 = pneg %p78
        $region26: #{tpu_custom_call.1} parent=23 // pred_check_branch
          %258 = sbr.rel (%p256) target = $region28
        $region27: #{tpu_custom_call.1} parent=23 // pred_region
          %s259 = sand.u32 %s16, 1
          %s260 = scalar_lea.sflag [#allocation4], %s259
          %s261 = sand.u32 %s68, 1
          %s262 = smul.addr %s261, 192
          %s263 = scalar_lea.vmem [#allocation8], %s262
          %265 = vsyncadd %s260, 0
          %s266 = smul.addr %s16, 48
          %s267 = smul.addr %s266, 4
          %s268 = scalar_lea.hbm %s2, %s267
          %s269 = sshll.u32 %s268, 4
          %s270 = int_to_ptr.hbm [resolvable:$true] %s269
          %s271 = sshll.u32 %s263, 4
          %s272 = int_to_ptr.vmem [resolvable:$true] %s271
          %277 = dma.hbm_to_vmem [thread:$0]  %s270, 3072, %s272, %s260, 192, 192, 12
        $region28: #{tpu_custom_call.1} parent=23 // pred_fallthru
          _
        // Predicated region
        $region29: #{tpu_custom_call.1} parent=23 // pred_check
          %p278 = pneg %p104
        $region30: #{tpu_custom_call.1} parent=23 // pred_check_branch
          %280 = sbr.rel (%p278) target = $region32
        $region31: #{tpu_custom_call.1} parent=23 // pred_region
          %s281 = sand.u32 %s16, 1
          %s282 = scalar_lea.sflag [#allocation4], %s281
          %s283 = sand.u32 %s94, 1
          %s284 = smul.addr %s283, 64
          %s285 = scalar_lea.vmem [#allocation9], %s284
          %287 = vsyncadd %s282, 0
          %s288 = smul.addr %s16, 16
          %s289 = smul.addr %s288, 4
          %s290 = scalar_lea.hbm %s3, %s289
          %s291 = sshll.u32 %s290, 4
          %s292 = int_to_ptr.hbm [resolvable:$true] %s291
          %s293 = sshll.u32 %s285, 4
          %s294 = int_to_ptr.vmem [resolvable:$true] %s293
          %299 = dma.hbm_to_vmem [thread:$0]  %s292, 1024, %s294, %s282, 64, 64, 4
        $region32: #{tpu_custom_call.1} parent=23 // pred_fallthru
          _
        // Predicated region
        $region33: #{tpu_custom_call.1} parent=23 // pred_check
          %p300 = pneg %p130
        $region34: #{tpu_custom_call.1} parent=23 // pred_check_branch
          %302 = sbr.rel (%p300) target = $region36
        $region35: #{tpu_custom_call.1} parent=23 // pred_region
          %s303 = sand.u32 %s16, 1
          %s304 = scalar_lea.sflag [#allocation4], %s303
          %s305 = sand.u32 %s120, 1
          %s306 = smul.addr %s305, 128
          %s307 = scalar_lea.vmem [#allocation10], %s306
          %309 = vsyncadd %s304, 0
          %s310 = smul.addr %s16, 32
          %s311 = smul.addr %s310, 4
          %s312 = scalar_lea.hbm %s4, %s311
          %s313 = sshll.u32 %s312, 4
          %s314 = int_to_ptr.hbm [resolvable:$true] %s313
          %s315 = sshll.u32 %s307, 4
          %s316 = int_to_ptr.vmem [resolvable:$true] %s315
          %321 = dma.hbm_to_vmem [thread:$0]  %s314, 2048, %s316, %s304, 128, 128, 8
        $region36: #{tpu_custom_call.1} parent=23 // pred_fallthru
          _
        // Predicated region
        $region37: #{tpu_custom_call.1} parent=23 // pred_check
          %p322 = pneg %p156
        $region38: #{tpu_custom_call.1} parent=23 // pred_check_branch
          %324 = sbr.rel (%p322) target = $region40
        $region39: #{tpu_custom_call.1} parent=23 // pred_region
          %s325 = sand.u32 %s16, 1
          %s326 = scalar_lea.sflag [#allocation4], %s325
          %s327 = sand.u32 %s146, 1
          %s328 = smul.addr %s327, 128
          %s329 = scalar_lea.vmem [#allocation11], %s328
          %331 = vsyncadd %s326, 0
          %s332 = smul.addr %s16, 32
          %s333 = smul.addr %s332, 4
          %s334 = scalar_lea.hbm %s5, %s333
          %s335 = sshll.u32 %s334, 4
          %s336 = int_to_ptr.hbm [resolvable:$true] %s335
          %s337 = sshll.u32 %s329, 4
          %s338 = int_to_ptr.vmem [resolvable:$true] %s337
          %343 = dma.hbm_to_vmem [thread:$0]  %s336, 2048, %s338, %s326, 64, 64, 4
        $region40: #{tpu_custom_call.1} parent=23 // pred_fallthru
          _
        // Predicated region
        $region41: #{tpu_custom_call.1} parent=23 // pred_check
          %p344 = pneg %p182
        $region42: #{tpu_custom_call.1} parent=23 // pred_check_branch
          %346 = sbr.rel (%p344) target = $region44
        $region43: #{tpu_custom_call.1} parent=23 // pred_region
          %s347 = sand.u32 %s16, 1
          %s348 = scalar_lea.sflag [#allocation4], %s347
          %s349 = sand.u32 %s172, 1
          %s350 = smul.addr %s349, 48
          %s351 = scalar_lea.vmem [#allocation12], %s350
          %353 = vsyncadd %s348, 0
          %s354 = smul.addr %s16, 6
          %s355 = smul.addr %s354, 8
          %s356 = scalar_lea.hbm %s6, %s355
          %s357 = sshll.u32 %s356, 4
          %s358 = int_to_ptr.hbm [resolvable:$true] %s357
          %s359 = sshll.u32 %s351, 4
          %s360 = int_to_ptr.vmem [resolvable:$true] %s359
          %365 = dma.hbm_to_vmem [thread:$0]  %s358, 768, %s360, %s348, 384, 384, 24
        $region44: #{tpu_custom_call.1} parent=23 // pred_fallthru
          _
      $region24: #{tpu_custom_call.1} parent=5 // pred_fallthru
        _
      %p366 = scmp.le.s32.totalorder 1, %s16
      %p367 = scmp.lt.s32.totalorder %s16, 3
      %p368 = pnand %p366, %p367
      %p369 = pneg %p368
      // Predicated region
      $region45: #{tpu_custom_call.1} parent=5 // pred_check
        _
      $region46: #{tpu_custom_call.1} parent=5 // pred_check_branch
        %371 = sbr.rel (%p368) target = $region48
      $region47: #{tpu_custom_call.1} parent=5 // pred_region
        %s372 = ssub.s32 %s16, 1
        // Predicated region
        $region49: #{tpu_custom_call.1} parent=47 // pred_check
          %p373 = pneg %p37
        $region50: #{tpu_custom_call.1} parent=47 // pred_check_branch
          %375 = sbr.rel (%p373) target = $region52
        $region51: #{tpu_custom_call.1} parent=47 // pred_region
          %377 = dma.done [#allocation4], 256
        $region52: #{tpu_custom_call.1} parent=47 // pred_fallthru
          _
        // Predicated region
        $region53: #{tpu_custom_call.1} parent=47 // pred_check
          %p378 = pneg %p58
        $region54: #{tpu_custom_call.1} parent=47 // pred_check_branch
          %380 = sbr.rel (%p378) target = $region56
        $region55: #{tpu_custom_call.1} parent=47 // pred_region
          %382 = dma.done [#allocation7], 256
        $region56: #{tpu_custom_call.1} parent=47 // pred_fallthru
          _
        %s383 = sand.u32 %s21, 1
        %s384 = scalar_lea.sflag [#allocation4], %s383
        %s385 = sand.u32 %s71, 1
        %s386 = smul.addr %s385, 192
        %s387 = scalar_lea.vmem [#allocation8], %s386
        // Predicated region
        $region57: #{tpu_custom_call.1} parent=47 // pred_check
          %p388 = pneg %p84
        $region58: #{tpu_custom_call.1} parent=47 // pred_check_branch
          %390 = sbr.rel (%p388) target = $region60
        $region59: #{tpu_custom_call.1} parent=47 // pred_region
          %392 = dma.done %s384, 3072
        $region60: #{tpu_custom_call.1} parent=47 // pred_fallthru
          _
        %s393 = sand.u32 %s21, 1
        %s394 = scalar_lea.sflag [#allocation4], %s393
        %s395 = sand.u32 %s97, 1
        %s396 = smul.addr %s395, 64
        %s397 = scalar_lea.vmem [#allocation9], %s396
        // Predicated region
        $region61: #{tpu_custom_call.1} parent=47 // pred_check
          %p398 = pneg %p110
        $region62: #{tpu_custom_call.1} parent=47 // pred_check_branch
          %400 = sbr.rel (%p398) target = $region64
        $region63: #{tpu_custom_call.1} parent=47 // pred_region
          %402 = dma.done %s394, 1024
        $region64: #{tpu_custom_call.1} parent=47 // pred_fallthru
          _
        %s403 = sand.u32 %s21, 1
        %s404 = scalar_lea.sflag [#allocation4], %s403
        %s405 = sand.u32 %s123, 1
        %s406 = smul.addr %s405, 128
        %s407 = scalar_lea.vmem [#allocation10], %s406
        // Predicated region
        $region65: #{tpu_custom_call.1} parent=47 // pred_check
          %p408 = pneg %p136
        $region66: #{tpu_custom_call.1} parent=47 // pred_check_branch
          %410 = sbr.rel (%p408) target = $region68
        $region67: #{tpu_custom_call.1} parent=47 // pred_region
          %412 = dma.done %s404, 2048
        $region68: #{tpu_custom_call.1} parent=47 // pred_fallthru
          _
        %s413 = sand.u32 %s21, 1
        %s414 = scalar_lea.sflag [#allocation4], %s413
        %s415 = sand.u32 %s149, 1
        %s416 = smul.addr %s415, 128
        %s417 = scalar_lea.vmem [#allocation11], %s416
        // Predicated region
        $region69: #{tpu_custom_call.1} parent=47 // pred_check
          %p418 = pneg %p162
        $region70: #{tpu_custom_call.1} parent=47 // pred_check_branch
          %420 = sbr.rel (%p418) target = $region72
        $region71: #{tpu_custom_call.1} parent=47 // pred_region
          %422 = dma.done %s414, 2048
        $region72: #{tpu_custom_call.1} parent=47 // pred_fallthru
          _
        %s423 = sand.u32 %s21, 1
        %s424 = scalar_lea.sflag [#allocation4], %s423
        %s425 = sand.u32 %s175, 1
        %s426 = smul.addr %s425, 48
        %s427 = scalar_lea.vmem [#allocation12], %s426
        // Predicated region
        $region73: #{tpu_custom_call.1} parent=47 // pred_check
          %p428 = pneg %p188
        $region74: #{tpu_custom_call.1} parent=47 // pred_check_branch
          %430 = sbr.rel (%p428) target = $region76
        $region75: #{tpu_custom_call.1} parent=47 // pred_region
          %432 = dma.done %s424, 768
        $region76: #{tpu_custom_call.1} parent=47 // pred_fallthru
          _
        %p433 = pneg %p37
        %p434 = pneg %p34
        %p435 = pneg %p58
        %p436 = pneg %p55
        %s437 = sand.u32 %s21, 1
        %s438 = scalar_lea.sflag [#allocation4], %s437
        %s439 = sand.u32 %s71, 1
        %s440 = smul.addr %s439, 192
        %s441 = scalar_lea.vmem [#allocation8], %s440
        %p442 = pneg %p84
        %p443 = pneg %p81
        %s444 = sand.u32 %s21, 1
        %s445 = scalar_lea.sflag [#allocation4], %s444
        %s446 = sand.u32 %s97, 1
        %s447 = smul.addr %s446, 64
        %s448 = scalar_lea.vmem [#allocation9], %s447
        %p449 = pneg %p110
        %p450 = pneg %p107
        %s451 = sand.u32 %s21, 1
        %s452 = scalar_lea.sflag [#allocation4], %s451
        %s453 = sand.u32 %s123, 1
        %s454 = smul.addr %s453, 128
        %s455 = scalar_lea.vmem [#allocation10], %s454
        %p456 = pneg %p136
        %p457 = pneg %p133
        %s458 = sand.u32 %s21, 1
        %s459 = scalar_lea.sflag [#allocation4], %s458
        %s460 = sand.u32 %s149, 1
        %s461 = smul.addr %s460, 128
        %s462 = scalar_lea.vmem [#allocation11], %s461
        %p463 = pneg %p162
        %p464 = pneg %p159
        %s465 = sand.u32 %s21, 1
        %s466 = scalar_lea.sflag [#allocation4], %s465
        %s467 = sand.u32 %s175, 1
        %s468 = smul.addr %s467, 48
        %s469 = scalar_lea.vmem [#allocation12], %s468
        %p470 = pneg %p188
        %p471 = pneg %p185
        %p472 = pneg %p209
        %p473 = pneg %p206
        %v475 = vld [vmem:[%s427] ss:$8 sm:$0x7]
        %v476 = vld [vmem:[%s427 + $0x1] ss:$0 sm:$0xff]
        %s477 = scalar_lea.vmem %s427, 2 [#allocation12]
        %v478 = vld [vmem:[%s477] ss:$8 sm:$0x3]
        %v479 = vld [vmem:[%s427 + $0x3] ss:$0 sm:$0xff]
        %v480 = vld [vmem:[%s427 + $0x4] ss:$0 sm:$0xff]
        %v481 = vld [vmem:[%s427 + $0x5] ss:$0 sm:$0xff]
        %v482 = vld [vmem:[%s427 + $0x6] ss:$0 sm:$0xff]
        %v483 = vld [vmem:[%s427 + $0x7] ss:$0 sm:$0xff]
        %v484 = vld [vmem:[%s427 + $0x18] ss:$0 sm:$0xff]
        %v485 = vld [vmem:[%s427 + $0x19] ss:$0 sm:$0xff]
        %p486 = scmp.eq.s32.totalorder %s21, 0
        // Predicated region
        $region77: #{tpu_custom_call.1} parent=47 // pred_check
          %p487 = pneg %p486
        $region78: #{tpu_custom_call.1} parent=47 // pred_check_branch
          %489 = sbr.rel (%p487) target = $region80
        $region79: #{tpu_custom_call.1} parent=47 // pred_region
          %v490 = vld [vmem:[#allocation3] sm:$0xff]
          %v491 = vld [vmem:[#allocation3 + $0x8] sm:$0xff]
          %492 = vadd.xlane.f32.xlu0 %v490
          %v493 = vpop.xlane.xlu0 %492
          %494 = vadd.xlane.f32.xlu0 %v491
          %v495 = vpop.xlane.xlu0 %494
          %v496 = vrcp.pop 128.0
          %v497 = vmul.f32 128.0, %v496
          %v498 = vsub.f32 1.0, %v497
          %v499 = vmul.f32 %v496, %v498
          %v500 = vadd.f32 %v496, %v499
          %vm501 = vweird.f32 %v496
          %v502 = vsel %vm501, %v496, %v500
          %v503 = vmul.f32 %v493, %v502
          %v504 = vmul.f32 %v495, %v502
          %v505 = vsub.f32 %v490, %v503
          %v506 = vsub.f32 %v491, %v504
          %v507 = vmul.f32 %v505, %v505
          %v508 = vmul.f32 %v506, %v506
          %509 = vadd.xlane.f32.xlu0 %v507
          %v510 = vpop.xlane.xlu0 %509
          %511 = vadd.xlane.f32.xlu0 %v508
          %v512 = vpop.xlane.xlu0 %511
          %v513 = vmul.f32 %v510, %v502
          %v514 = vmul.f32 %v512, %v502
          %v515 = vadd.f32 %v513, 1e-12
          %v516 = vadd.f32 %v514, 1e-12
          %v517 = vrsqrt.pop %v515
          %v518 = vmul.f32 %v517, %v515
          %v519 = vmul.f32 %v518, %v517
          %v520 = vmul.f32 0.5, %v519
          %v521 = vsub.f32 1.5, %v520
          %v522 = vmul.f32 %v517, %v521
          %vm523 = vweird.f32 %v515
          %vm524 = vweird.f32 %v517
          %vm525 = vmor %vm523, %vm524
          %v526 = vsel %vm525, %v517, %v522
          %v527 = vrsqrt.pop %v516
          %v528 = vmul.f32 %v527, %v516
          %v529 = vmul.f32 %v528, %v527
          %v530 = vmul.f32 0.5, %v529
          %v531 = vsub.f32 1.5, %v530
          %v532 = vmul.f32 %v527, %v531
          %vm533 = vweird.f32 %v516
          %vm534 = vweird.f32 %v527
          %vm535 = vmor %vm533, %vm534
          %v536 = vsel %vm535, %v527, %v532
          %v537 = vmul.f32 %v505, %v526
          %v538 = vmul.f32 %v506, %v536
          %v539 = vmul.f32 %v537, %v484
          %v540 = vmul.f32 %v538, %v484
          %v541 = vadd.f32 %v539, %v485
          %v542 = vadd.f32 %v540, %v485
          %543 = vst [vmem:[#allocation2] sm:$0xff] %v541
          %544 = vst [vmem:[#allocation2 + $0x8] sm:$0xff] %v542
        $region80: #{tpu_custom_call.1} parent=47 // pred_fallthru
          _
        %v545 = vld [vmem:[#allocation2] sm:$0xff]
        %v546 = vld [vmem:[#allocation2 + $0x8] sm:$0xff]
        %v547 = vpack.c.bf16 %v546, %v545
        %v548 = vld [vmem:[%s387] sm:$0xff]
        %v549 = vld [vmem:[%s387 + $0x8] sm:$0xf]
        %v550 = vld [vmem:[%s387 + $0xc] sm:$0xff]
        %v551 = vld [vmem:[%s387 + $0x14] sm:$0xf]
        %v552 = vld [vmem:[%s387 + $0x18] sm:$0xff]
        %v553 = vld [vmem:[%s387 + $0x20] sm:$0xf]
        %v554 = vld [vmem:[%s387 + $0x24] sm:$0xff]
        %v555 = vld [vmem:[%s387 + $0x2c] sm:$0xf]
        %v556 = vld [vmem:[%s387 + $0x30] sm:$0xff]
        %v557 = vld [vmem:[%s387 + $0x38] sm:$0xf]
        %v558 = vld [vmem:[%s387 + $0x3c] sm:$0xff]
        %v559 = vld [vmem:[%s387 + $0x44] sm:$0xf]
        %v560 = vld [vmem:[%s387 + $0x48] sm:$0xff]
        %v561 = vld [vmem:[%s387 + $0x50] sm:$0xf]
        %v562 = vld [vmem:[%s387 + $0x54] sm:$0xff]
        %v563 = vld [vmem:[%s387 + $0x5c] sm:$0xf]
        %v564 = vld [vmem:[%s387 + $0x60] sm:$0xff]
        %v565 = vld [vmem:[%s387 + $0x68] sm:$0xf]
        %v566 = vld [vmem:[%s387 + $0x6c] sm:$0xff]
        %v567 = vld [vmem:[%s387 + $0x74] sm:$0xf]
        %v568 = vld [vmem:[%s387 + $0x78] sm:$0xff]
        %v569 = vld [vmem:[%s387 + $0x80] sm:$0xf]
        %v570 = vld [vmem:[%s387 + $0x84] sm:$0xff]
        %v571 = vld [vmem:[%s387 + $0x8c] sm:$0xf]
        %v572 = vld [vmem:[%s387 + $0x90] sm:$0xff]
        %v573 = vld [vmem:[%s387 + $0x98] sm:$0xf]
        %v574 = vld [vmem:[%s387 + $0x9c] sm:$0xff]
        %v575 = vld [vmem:[%s387 + $0xa4] sm:$0xf]
        %v576 = vld [vmem:[%s387 + $0xa8] sm:$0xff]
        %v577 = vld [vmem:[%s387 + $0xb0] sm:$0xf]
        %v578 = vld [vmem:[%s387 + $0xb4] sm:$0xff]
        %v579 = vld [vmem:[%s387 + $0xbc] sm:$0xf]
        %v581 = vperm.slane %v475, 0
        %v582 = vperm.slane %v475, 1
        %v583 = vperm.slane %v475, 2
        %v619 = vunpack.c.l.b16 %v548
        %v620 = vunpack.c.h.b16 %v548
        %v621 = vunpack.c.l.b16 %v549
        %v622 = vunpack.c.l.b16 %v550
        %v623 = vunpack.c.h.b16 %v550
        %v624 = vunpack.c.l.b16 %v551
        %v625 = vunpack.c.l.b16 %v552
        %v626 = vunpack.c.h.b16 %v552
        %v627 = vunpack.c.l.b16 %v553
        %v628 = vunpack.c.l.b16 %v554
        %v629 = vunpack.c.h.b16 %v554
        %v630 = vunpack.c.l.b16 %v555
        %v631 = vunpack.c.l.b16 %v556
        %v632 = vunpack.c.h.b16 %v556
        %v633 = vunpack.c.l.b16 %v557
        %v634 = vunpack.c.l.b16 %v558
        %v635 = vunpack.c.h.b16 %v558
        %v636 = vunpack.c.l.b16 %v559
        %v637 = vunpack.c.l.b16 %v560
        %v638 = vunpack.c.h.b16 %v560
        %v639 = vunpack.c.l.b16 %v561
        %v640 = vunpack.c.l.b16 %v562
        %v641 = vunpack.c.h.b16 %v562
        %v642 = vunpack.c.l.b16 %v563
        %v643 = vunpack.c.l.b16 %v564
        %v644 = vunpack.c.h.b16 %v564
        %v645 = vunpack.c.l.b16 %v565
        %v646 = vunpack.c.l.b16 %v566
        %v647 = vunpack.c.h.b16 %v566
        %v648 = vunpack.c.l.b16 %v567
        %v649 = vunpack.c.l.b16 %v568
        %v650 = vunpack.c.h.b16 %v568
        %v651 = vunpack.c.l.b16 %v569
        %v652 = vunpack.c.l.b16 %v570
        %v653 = vunpack.c.h.b16 %v570
        %v654 = vunpack.c.l.b16 %v571
        %v655 = vunpack.c.l.b16 %v572
        %v656 = vunpack.c.h.b16 %v572
        %v657 = vunpack.c.l.b16 %v573
        %v658 = vunpack.c.l.b16 %v574
        %v659 = vunpack.c.h.b16 %v574
        %v660 = vunpack.c.l.b16 %v575
        %v661 = vunpack.c.l.b16 %v576
        %v662 = vunpack.c.h.b16 %v576
        %v663 = vunpack.c.l.b16 %v577
        %v664 = vunpack.c.l.b16 %v578
        %v665 = vunpack.c.h.b16 %v578
        %v666 = vunpack.c.l.b16 %v579
        %v667 = vpack.c.b16 %v622, %v619
        %v668 = vpack.c.b16 %v623, %v620
        %v669 = vpack.c.b16 %v624, %v621
        %v670 = vpack.c.b16 %v628, %v625
        %v671 = vpack.c.b16 %v629, %v626
        %v672 = vpack.c.b16 %v630, %v627
        %v673 = vpack.c.b16 %v634, %v631
        %v674 = vpack.c.b16 %v635, %v632
        %v675 = vpack.c.b16 %v636, %v633
        %v676 = vpack.c.b16 %v640, %v637
        %v677 = vpack.c.b16 %v641, %v638
        %v678 = vpack.c.b16 %v642, %v639
        %v679 = vpack.c.b16 %v646, %v643
        %v680 = vpack.c.b16 %v647, %v644
        %v681 = vpack.c.b16 %v648, %v645
        %v682 = vpack.c.b16 %v652, %v649
        %v683 = vpack.c.b16 %v653, %v650
        %v684 = vpack.c.b16 %v654, %v651
        %v685 = vpack.c.b16 %v658, %v655
        %v686 = vpack.c.b16 %v659, %v656
        %v687 = vpack.c.b16 %v660, %v657
        %v688 = vpack.c.b16 %v664, %v661
        %v689 = vpack.c.b16 %v665, %v662
        %v690 = vpack.c.b16 %v666, %v663
        %715 = vmatpush.bf16.msra.mxu0 %v688
        %716 = vmatpush.bf16.msra.mxu0 %v685
        %717 = vmatpush.bf16.msra.mxu0 %v682
        %718 = vmatpush.bf16.msra.mxu0 %v679
        %719 = vmatpush.bf16.msra.mxu0 %v676
        %720 = vmatpush.bf16.msra.mxu0 %v673
        %721 = vmatpush.bf16.msra.mxu0 %v670
        %722 = vmatpush.bf16.msra.mxu0 %v667
        %723 = vmatmul.bf16.gmra.mxu0 %v547
        %v724 = vpop.f32.mrf.mxu0
        %v725 = vadd.f32 %v581, %v724
        %v726 = vpop.f32.mrf.mxu0
        %v727 = vadd.f32 %v581, %v726
        %728 = vdwg.mxu0
        %729 = vmatpush.bf16.msra.mxu0 %v689
        %730 = vmatpush.bf16.msra.mxu0 %v686
        %731 = vmatpush.bf16.msra.mxu0 %v683
        %732 = vmatpush.bf16.msra.mxu0 %v680
        %733 = vmatpush.bf16.msra.mxu0 %v677
        %734 = vmatpush.bf16.msra.mxu0 %v674
        %735 = vmatpush.bf16.msra.mxu0 %v671
        %736 = vmatpush.bf16.msra.mxu0 %v668
        %737 = vmatmul.bf16.gmra.mxu0 %v547
        %v738 = vpop.f32.mrf.mxu0
        %v739 = vadd.f32 %v582, %v738
        %v740 = vpop.f32.mrf.mxu0
        %v741 = vadd.f32 %v582, %v740
        %742 = vdwg.mxu0
        %743 = vmatpush.bf16.msra.mxu0 %v690
        %744 = vmatpush.bf16.msra.mxu0 %v687
        %745 = vmatpush.bf16.msra.mxu0 %v684
        %746 = vmatpush.bf16.msra.mxu0 %v681
        %747 = vmatpush.bf16.msra.mxu0 %v678
        %748 = vmatpush.bf16.msra.mxu0 %v675
        %749 = vmatpush.bf16.msra.mxu0 %v672
        %750 = vmatpush.bf16.msra.mxu0 %v669
        %751 = vmatmul.bf16.gmra.mxu0 %v547
        %v752 = vpop.f32.mrf.mxu0
        %v753 = vadd.f32 %v583, %v752
        %v754 = vpop.f32.mrf.mxu0
        %v755 = vadd.f32 %v583, %v754
        %756 = vdwg.mxu0
        %759 = vrot.lane.b32.xlu0 %v725, 96
        %v760 = vpop.permute.xlu0 %759
        %761 = vrot.lane.b32.xlu0 %v727, 96
        %v762 = vpop.permute.xlu0 %761
        %765 = vrot.lane.b32.xlu0 %v725, 64
        %v766 = vpop.permute.xlu0 %765
        %767 = vrot.lane.b32.xlu0 %v727, 64
        %v768 = vpop.permute.xlu0 %767
        %771 = vrot.lane.b32.xlu0 %v725, 32
        %v772 = vpop.permute.xlu0 %771
        %773 = vrot.lane.b32.xlu0 %v727, 32
        %v774 = vpop.permute.xlu0 %773
        %v777 = vpack.c.bf16 %v725, %v725
        %v778 = vpack.c.bf16 %v727, %v727
        %v779 = vpack.c.bf16 %v760, %v760
        %v780 = vpack.c.bf16 %v762, %v762
        %v781 = vpack.c.bf16 %v766, %v766
        %v782 = vpack.c.bf16 %v768, %v768
        %v783 = vpack.c.bf16 %v772, %v772
        %v784 = vpack.c.bf16 %v774, %v774
        %787 = vrot.lane.b32.xlu0 %v739, 96
        %v788 = vpop.permute.xlu0 %787
        %789 = vrot.lane.b32.xlu0 %v741, 96
        %v790 = vpop.permute.xlu0 %789
        %793 = vrot.lane.b32.xlu0 %v739, 64
        %v794 = vpop.permute.xlu0 %793
        %795 = vrot.lane.b32.xlu0 %v741, 64
        %v796 = vpop.permute.xlu0 %795
        %799 = vrot.lane.b32.xlu0 %v739, 32
        %v800 = vpop.permute.xlu0 %799
        %801 = vrot.lane.b32.xlu0 %v741, 32
        %v802 = vpop.permute.xlu0 %801
        %v805 = vpack.c.bf16 %v739, %v739
        %v806 = vpack.c.bf16 %v741, %v741
        %v807 = vpack.c.bf16 %v788, %v788
        %v808 = vpack.c.bf16 %v790, %v790
        %v809 = vpack.c.bf16 %v794, %v794
        %v810 = vpack.c.bf16 %v796, %v796
        %v811 = vpack.c.bf16 %v800, %v800
        %v812 = vpack.c.bf16 %v802, %v802
        %815 = vrot.lane.b32.xlu0 %v753, 96
        %v816 = vpop.permute.xlu0 %815
        %817 = vrot.lane.b32.xlu0 %v755, 96
        %v818 = vpop.permute.xlu0 %817
        %821 = vrot.lane.b32.xlu0 %v753, 64
        %v822 = vpop.permute.xlu0 %821
        %823 = vrot.lane.b32.xlu0 %v755, 64
        %v824 = vpop.permute.xlu0 %823
        %827 = vrot.lane.b32.xlu0 %v753, 32
        %v828 = vpop.permute.xlu0 %827
        %829 = vrot.lane.b32.xlu0 %v755, 32
        %v830 = vpop.permute.xlu0 %829
        %v833 = vpack.c.bf16 %v753, %v753
        %v834 = vpack.c.bf16 %v755, %v755
        %v835 = vpack.c.bf16 %v816, %v816
        %v836 = vpack.c.bf16 %v818, %v818
        %v837 = vpack.c.bf16 %v822, %v822
        %v838 = vpack.c.bf16 %v824, %v824
        %v839 = vpack.c.bf16 %v828, %v828
        %v840 = vpack.c.bf16 %v830, %v830
        %v841 = vld [vmem:[#allocation6] sm:$0xff]
        %v842 = vld [vmem:[#allocation6 + $0x8] sm:$0xff]
        %v845 = vunpack.c.l.b16 %v777
        %v846 = vunpack.c.l.b16 %v778
        %v847 = vpack.c.b16 %v846, %v845
        %v850 = vunpack.c.l.b16 %v805
        %v851 = vunpack.c.l.b16 %v806
        %v852 = vpack.c.b16 %v851, %v850
        %vm853 = vcmask 261120
        %v855 = vsel %vm853, %v847, 0
        %v858 = vsel %vm853, %v852, 0
        %860 = vmatpush.bf16.xpose.msra.mxu0 0
        %861 = vmatpush.bf16.xpose.msra.mxu0 0
        %862 = vmatpush.bf16.xpose.msra.mxu0 0
        %863 = vmatpush.bf16.xpose.msra.mxu0 0
        %864 = vmatpush.bf16.xpose.msra.mxu0 0
        %865 = vmatpush.bf16.xpose.msra.mxu0 0
        %866 = vmatpush.bf16.xpose.msra.mxu0 0
        %867 = vmatpush.bf16.xpose.msra.mxu0 %v858
        %868 = vmatmul.bf16.gmra.mxu0 %v855
        %v869 = vpop.f32.mrf.mxu0
        %v870 = vadd.f32 %v841, %v869
        %v871 = vpop.f32.mrf.mxu0
        %v872 = vadd.f32 %v842, %v871
        %873 = vdwg.mxu0
        %v876 = vunpack.c.l.b16 %v779
        %v877 = vunpack.c.l.b16 %v780
        %v878 = vpack.c.b16 %v877, %v876
        %v881 = vunpack.c.l.b16 %v807
        %v882 = vunpack.c.l.b16 %v808
        %v883 = vpack.c.b16 %v882, %v881
        %v885 = vsel %vm853, %v878, 0
        %v888 = vsel %vm853, %v883, 0
        %890 = vmatpush.bf16.xpose.msra.mxu0 0
        %891 = vmatpush.bf16.xpose.msra.mxu0 0
        %892 = vmatpush.bf16.xpose.msra.mxu0 0
        %893 = vmatpush.bf16.xpose.msra.mxu0 0
        %894 = vmatpush.bf16.xpose.msra.mxu0 0
        %895 = vmatpush.bf16.xpose.msra.mxu0 0
        %896 = vmatpush.bf16.xpose.msra.mxu0 0
        %897 = vmatpush.bf16.xpose.msra.mxu0 %v888
        %898 = vmatmul.bf16.gmra.mxu0 %v885
        %v899 = vpop.f32.mrf.mxu0
        %v900 = vadd.f32 %v841, %v899
        %v901 = vpop.f32.mrf.mxu0
        %v902 = vadd.f32 %v842, %v901
        %903 = vdwg.mxu0
        %v906 = vunpack.c.l.b16 %v781
        %v907 = vunpack.c.l.b16 %v782
        %v908 = vpack.c.b16 %v907, %v906
        %v911 = vunpack.c.l.b16 %v809
        %v912 = vunpack.c.l.b16 %v810
        %v913 = vpack.c.b16 %v912, %v911
        %v915 = vsel %vm853, %v908, 0
        %v918 = vsel %vm853, %v913, 0
        %920 = vmatpush.bf16.xpose.msra.mxu0 0
        %921 = vmatpush.bf16.xpose.msra.mxu0 0
        %922 = vmatpush.bf16.xpose.msra.mxu0 0
        %923 = vmatpush.bf16.xpose.msra.mxu0 0
        %924 = vmatpush.bf16.xpose.msra.mxu0 0
        %925 = vmatpush.bf16.xpose.msra.mxu0 0
        %926 = vmatpush.bf16.xpose.msra.mxu0 0
        %927 = vmatpush.bf16.xpose.msra.mxu0 %v918
        %928 = vmatmul.bf16.gmra.mxu0 %v915
        %v929 = vpop.f32.mrf.mxu0
        %v930 = vadd.f32 %v841, %v929
        %v931 = vpop.f32.mrf.mxu0
        %v932 = vadd.f32 %v842, %v931
        %933 = vdwg.mxu0
        %v936 = vunpack.c.l.b16 %v783
        %v937 = vunpack.c.l.b16 %v784
        %v938 = vpack.c.b16 %v937, %v936
        %v941 = vunpack.c.l.b16 %v811
        %v942 = vunpack.c.l.b16 %v812
        %v943 = vpack.c.b16 %v942, %v941
        %v945 = vsel %vm853, %v938, 0
        %v948 = vsel %vm853, %v943, 0
        %950 = vmatpush.bf16.xpose.msra.mxu0 0
        %951 = vmatpush.bf16.xpose.msra.mxu0 0
        %952 = vmatpush.bf16.xpose.msra.mxu0 0
        %953 = vmatpush.bf16.xpose.msra.mxu0 0
        %954 = vmatpush.bf16.xpose.msra.mxu0 0
        %955 = vmatpush.bf16.xpose.msra.mxu0 0
        %956 = vmatpush.bf16.xpose.msra.mxu0 0
        %957 = vmatpush.bf16.xpose.msra.mxu0 %v948
        %958 = vmatmul.bf16.gmra.mxu0 %v945
        %v959 = vpop.f32.mrf.mxu0
        %v960 = vadd.f32 %v841, %v959
        %v961 = vpop.f32.mrf.mxu0
        %v962 = vadd.f32 %v842, %v961
        %963 = vdwg.mxu0
        %vm964 = vcmask 130048
        %v965 = vsel %vm964, %v870, -inf
        %966 = vmax.xlane.f32.xlu0 %v965
        %v967 = vpop.xlane.xlu0 %966
        %v968 = vsel %vm964, %v872, -inf
        %969 = vmax.xlane.f32.xlu0 %v968
        %v970 = vpop.xlane.xlu0 %969
        %v971 = vsel %vm964, %v900, -inf
        %972 = vmax.xlane.f32.xlu0 %v971
        %v973 = vpop.xlane.xlu0 %972
        %v974 = vsel %vm964, %v902, -inf
        %975 = vmax.xlane.f32.xlu0 %v974
        %v976 = vpop.xlane.xlu0 %975
        %v977 = vsel %vm964, %v930, -inf
        %978 = vmax.xlane.f32.xlu0 %v977
        %v979 = vpop.xlane.xlu0 %978
        %v980 = vsel %vm964, %v932, -inf
        %981 = vmax.xlane.f32.xlu0 %v980
        %v982 = vpop.xlane.xlu0 %981
        %v983 = vsel %vm964, %v960, -inf
        %984 = vmax.xlane.f32.xlu0 %v983
        %v985 = vpop.xlane.xlu0 %984
        %v986 = vsel %vm964, %v962, -inf
        %987 = vmax.xlane.f32.xlu0 %v986
        %v988 = vpop.xlane.xlu0 %987
        %v989 = vsub.f32 %v870, %v967
        %v990 = vsub.f32 %v872, %v970
        %v991 = vsub.f32 %v900, %v973
        %v992 = vsub.f32 %v902, %v976
        %v993 = vsub.f32 %v930, %v979
        %v994 = vsub.f32 %v932, %v982
        %v995 = vsub.f32 %v960, %v985
        %v996 = vsub.f32 %v962, %v988
        %v997 = vmul.f32 %v989, 1.442695
        %v998 = vpow.pop %v997
        %v999 = vmul.f32 %v990, 1.442695
        %v1000 = vpow.pop %v999
        %v1001 = vmul.f32 %v991, 1.442695
        %v1002 = vpow.pop %v1001
        %v1003 = vmul.f32 %v992, 1.442695
        %v1004 = vpow.pop %v1003
        %v1005 = vmul.f32 %v993, 1.442695
        %v1006 = vpow.pop %v1005
        %v1007 = vmul.f32 %v994, 1.442695
        %v1008 = vpow.pop %v1007
        %v1009 = vmul.f32 %v995, 1.442695
        %v1010 = vpow.pop %v1009
        %v1011 = vmul.f32 %v996, 1.442695
        %v1012 = vpow.pop %v1011
        %v1013 = vsel %vm964, %v998, 0.0
        %1014 = vadd.xlane.f32.xlu0 %v1013
        %v1015 = vpop.xlane.xlu0 %1014
        %v1016 = vsel %vm964, %v1000, 0.0
        %1017 = vadd.xlane.f32.xlu0 %v1016
        %v1018 = vpop.xlane.xlu0 %1017
        %v1019 = vsel %vm964, %v1002, 0.0
        %1020 = vadd.xlane.f32.xlu0 %v1019
        %v1021 = vpop.xlane.xlu0 %1020
        %v1022 = vsel %vm964, %v1004, 0.0
        %1023 = vadd.xlane.f32.xlu0 %v1022
        %v1024 = vpop.xlane.xlu0 %1023
        %v1025 = vsel %vm964, %v1006, 0.0
        %1026 = vadd.xlane.f32.xlu0 %v1025
        %v1027 = vpop.xlane.xlu0 %1026
        %v1028 = vsel %vm964, %v1008, 0.0
        %1029 = vadd.xlane.f32.xlu0 %v1028
        %v1030 = vpop.xlane.xlu0 %1029
        %v1031 = vsel %vm964, %v1010, 0.0
        %1032 = vadd.xlane.f32.xlu0 %v1031
        %v1033 = vpop.xlane.xlu0 %1032
        %v1034 = vsel %vm964, %v1012, 0.0
        %1035 = vadd.xlane.f32.xlu0 %v1034
        %v1036 = vpop.xlane.xlu0 %1035
        %v1037 = vrcp.pop %v1015
        %v1038 = vrcp.pop %v1018
        %v1039 = vrcp.pop %v1021
        %v1040 = vrcp.pop %v1024
        %v1041 = vrcp.pop %v1027
        %v1042 = vrcp.pop %v1030
        %v1043 = vrcp.pop %v1033
        %v1044 = vrcp.pop %v1036
        %v1045 = vmul.f32 %v998, %v1037
        %v1046 = vmul.f32 %v1000, %v1038
        %v1047 = vmul.f32 %v1002, %v1039
        %v1048 = vmul.f32 %v1004, %v1040
        %v1049 = vmul.f32 %v1006, %v1041
        %v1050 = vmul.f32 %v1008, %v1042
        %v1051 = vmul.f32 %v1010, %v1043
        %v1052 = vmul.f32 %v1012, %v1044
        %v1053 = vpack.c.bf16 %v1045, %v1045
        %v1054 = vpack.c.bf16 %v1046, %v1046
        %v1055 = vpack.c.bf16 %v1047, %v1047
        %v1056 = vpack.c.bf16 %v1048, %v1048
        %v1057 = vpack.c.bf16 %v1049, %v1049
        %v1058 = vpack.c.bf16 %v1050, %v1050
        %v1059 = vpack.c.bf16 %v1051, %v1051
        %v1060 = vpack.c.bf16 %v1052, %v1052
        %v1063 = vunpack.c.l.b16 %v1053
        %v1064 = vunpack.c.l.b16 %v1054
        %v1065 = vpack.c.b16 %v1064, %v1063
        %v1068 = vunpack.c.l.b16 %v833
        %v1069 = vunpack.c.l.b16 %v834
        %v1070 = vpack.c.b16 %v1069, %v1068
        %v1073 = vsel %vm964, %v1065, 0
        %1075 = vmatpush.bf16.msra.mxu0 0
        %1076 = vmatpush.bf16.msra.mxu0 0
        %1077 = vmatpush.bf16.msra.mxu0 0
        %1078 = vmatpush.bf16.msra.mxu0 0
        %1079 = vmatpush.bf16.msra.mxu0 0
        %1080 = vmatpush.bf16.msra.mxu0 0
        %1081 = vmatpush.bf16.msra.mxu0 0
        %1082 = vmatpush.bf16.msra.mxu0 %v1070
        %1083 = vmatmul.bf16.gmra.mxu0 %v1073
        %v1084 = vpop.f32.mrf.mxu0
        %v1085 = vadd.f32 0.0, %v1084
        %v1086 = vpop.f32.mrf.mxu0
        %v1087 = vadd.f32 0.0, %v1086
        %1088 = vdwg.mxu0
        %v1091 = vunpack.c.l.b16 %v1055
        %v1092 = vunpack.c.l.b16 %v1056
        %v1093 = vpack.c.b16 %v1092, %v1091
        %v1096 = vunpack.c.l.b16 %v835
        %v1097 = vunpack.c.l.b16 %v836
        %v1098 = vpack.c.b16 %v1097, %v1096
        %v1101 = vsel %vm964, %v1093, 0
        %1103 = vmatpush.bf16.msra.mxu0 0
        %1104 = vmatpush.bf16.msra.mxu0 0
        %1105 = vmatpush.bf16.msra.mxu0 0
        %1106 = vmatpush.bf16.msra.mxu0 0
        %1107 = vmatpush.bf16.msra.mxu0 0
        %1108 = vmatpush.bf16.msra.mxu0 0
        %1109 = vmatpush.bf16.msra.mxu0 0
        %1110 = vmatpush.bf16.msra.mxu0 %v1098
        %1111 = vmatmul.bf16.gmra.mxu0 %v1101
        %v1112 = vpop.f32.mrf.mxu0
        %v1113 = vadd.f32 0.0, %v1112
        %v1114 = vpop.f32.mrf.mxu0
        %v1115 = vadd.f32 0.0, %v1114
        %1116 = vdwg.mxu0
        %v1119 = vunpack.c.l.b16 %v1057
        %v1120 = vunpack.c.l.b16 %v1058
        %v1121 = vpack.c.b16 %v1120, %v1119
        %v1124 = vunpack.c.l.b16 %v837
        %v1125 = vunpack.c.l.b16 %v838
        %v1126 = vpack.c.b16 %v1125, %v1124
        %v1129 = vsel %vm964, %v1121, 0
        %1131 = vmatpush.bf16.msra.mxu0 0
        %1132 = vmatpush.bf16.msra.mxu0 0
        %1133 = vmatpush.bf16.msra.mxu0 0
        %1134 = vmatpush.bf16.msra.mxu0 0
        %1135 = vmatpush.bf16.msra.mxu0 0
        %1136 = vmatpush.bf16.msra.mxu0 0
        %1137 = vmatpush.bf16.msra.mxu0 0
        %1138 = vmatpush.bf16.msra.mxu0 %v1126
        %1139 = vmatmul.bf16.gmra.mxu0 %v1129
        %v1140 = vpop.f32.mrf.mxu0
        %v1141 = vadd.f32 0.0, %v1140
        %v1142 = vpop.f32.mrf.mxu0
        %v1143 = vadd.f32 0.0, %v1142
        %1144 = vdwg.mxu0
        %v1147 = vunpack.c.l.b16 %v1059
        %v1148 = vunpack.c.l.b16 %v1060
        %v1149 = vpack.c.b16 %v1148, %v1147
        %v1152 = vunpack.c.l.b16 %v839
        %v1153 = vunpack.c.l.b16 %v840
        %v1154 = vpack.c.b16 %v1153, %v1152
        %v1157 = vsel %vm964, %v1149, 0
        %1159 = vmatpush.bf16.msra.mxu0 0
        %1160 = vmatpush.bf16.msra.mxu0 0
        %1161 = vmatpush.bf16.msra.mxu0 0
        %1162 = vmatpush.bf16.msra.mxu0 0
        %1163 = vmatpush.bf16.msra.mxu0 0
        %1164 = vmatpush.bf16.msra.mxu0 0
        %1165 = vmatpush.bf16.msra.mxu0 0
        %1166 = vmatpush.bf16.msra.mxu0 %v1154
        %1167 = vmatmul.bf16.gmra.mxu0 %v1157
        %v1168 = vpop.f32.mrf.mxu0
        %v1169 = vadd.f32 0.0, %v1168
        %v1170 = vpop.f32.mrf.mxu0
        %v1171 = vadd.f32 0.0, %v1170
        %1172 = vdwg.mxu0
        %1175 = vrot.lane.b32.xlu0 %v1113, 32
        %v1176 = vpop.permute.xlu0 %1175
        %1177 = vrot.lane.b32.xlu0 %v1115, 32
        %v1178 = vpop.permute.xlu0 %1177
        %1183 = vrot.lane.b32.xlu0 %v1141, 64
        %v1184 = vpop.permute.xlu0 %1183
        %1185 = vrot.lane.b32.xlu0 %v1143, 64
        %v1186 = vpop.permute.xlu0 %1185
        %1191 = vrot.lane.b32.xlu0 %v1169, 96
        %v1192 = vpop.permute.xlu0 %1191
        %1193 = vrot.lane.b32.xlu0 %v1171, 96
        %v1194 = vpop.permute.xlu0 %1193
        %v1197 = vsel %vm853, %v1085, %v1176
        %v1198 = vsel %vm853, %v1087, %v1178
        %vm1199 = vcmask 523264
        %v1200 = vsel %vm1199, %v1197, %v1184
        %v1201 = vsel %vm1199, %v1198, %v1186
        %vm1202 = vcmask 785408
        %v1203 = vsel %vm1202, %v1200, %v1192
        %v1204 = vsel %vm1202, %v1201, %v1194
        %v1205 = vpack.c.bf16 %v1204, %v1203
        %v1206 = vld [vmem:[%s397] sm:$0xf]
        %v1207 = vld [vmem:[%s397 + $0x4] sm:$0xf]
        %v1208 = vld [vmem:[%s397 + $0x8] sm:$0xf]
        %v1209 = vld [vmem:[%s397 + $0xc] sm:$0xf]
        %v1210 = vld [vmem:[%s397 + $0x10] sm:$0xf]
        %v1211 = vld [vmem:[%s397 + $0x14] sm:$0xf]
        %v1212 = vld [vmem:[%s397 + $0x18] sm:$0xf]
        %v1213 = vld [vmem:[%s397 + $0x1c] sm:$0xf]
        %v1214 = vld [vmem:[%s397 + $0x20] sm:$0xf]
        %v1215 = vld [vmem:[%s397 + $0x24] sm:$0xf]
        %v1216 = vld [vmem:[%s397 + $0x28] sm:$0xf]
        %v1217 = vld [vmem:[%s397 + $0x2c] sm:$0xf]
        %v1218 = vld [vmem:[%s397 + $0x30] sm:$0xf]
        %v1219 = vld [vmem:[%s397 + $0x34] sm:$0xf]
        %v1220 = vld [vmem:[%s397 + $0x38] sm:$0xf]
        %v1221 = vld [vmem:[%s397 + $0x3c] sm:$0xf]
        %v1238 = vunpack.c.l.b16 %v1206
        %v1239 = vunpack.c.l.b16 %v1207
        %v1240 = vunpack.c.l.b16 %v1208
        %v1241 = vunpack.c.l.b16 %v1209
        %v1242 = vunpack.c.l.b16 %v1210
        %v1243 = vunpack.c.l.b16 %v1211
        %v1244 = vunpack.c.l.b16 %v1212
        %v1245 = vunpack.c.l.b16 %v1213
        %v1246 = vunpack.c.l.b16 %v1214
        %v1247 = vunpack.c.l.b16 %v1215
        %v1248 = vunpack.c.l.b16 %v1216
        %v1249 = vunpack.c.l.b16 %v1217
        %v1250 = vunpack.c.l.b16 %v1218
        %v1251 = vunpack.c.l.b16 %v1219
        %v1252 = vunpack.c.l.b16 %v1220
        %v1253 = vunpack.c.l.b16 %v1221
        %v1254 = vpack.c.b16 %v1239, %v1238
        %v1255 = vpack.c.b16 %v1241, %v1240
        %v1256 = vpack.c.b16 %v1243, %v1242
        %v1257 = vpack.c.b16 %v1245, %v1244
        %v1258 = vpack.c.b16 %v1247, %v1246
        %v1259 = vpack.c.b16 %v1249, %v1248
        %v1260 = vpack.c.b16 %v1251, %v1250
        %v1261 = vpack.c.b16 %v1253, %v1252
        %1270 = vmatpush.bf16.msra.mxu0 %v1261
        %1271 = vmatpush.bf16.msra.mxu0 %v1260
        %1272 = vmatpush.bf16.msra.mxu0 %v1259
        %1273 = vmatpush.bf16.msra.mxu0 %v1258
        %1274 = vmatpush.bf16.msra.mxu0 %v1257
        %1275 = vmatpush.bf16.msra.mxu0 %v1256
        %1276 = vmatpush.bf16.msra.mxu0 %v1255
        %1277 = vmatpush.bf16.msra.mxu0 %v1254
        %1278 = vmatmul.bf16.gmra.mxu0 %v1205
        %v1279 = vpop.f32.mrf.mxu0
        %v1280 = vadd.f32 %v476, %v1279
        %v1281 = vpop.f32.mrf.mxu0
        %v1282 = vadd.f32 %v476, %v1281
        %1283 = vdwg.mxu0
        %v1284 = vadd.f32 %v1280, %v545
        %v1285 = vadd.f32 %v1282, %v546
        %1286 = vadd.xlane.f32.xlu0 %v1284
        %v1287 = vpop.xlane.xlu0 %1286
        %1288 = vadd.xlane.f32.xlu0 %v1285
        %v1289 = vpop.xlane.xlu0 %1288
        %v1290 = vrcp.pop 128.0
        %v1291 = vmul.f32 128.0, %v1290
        %v1292 = vsub.f32 1.0, %v1291
        %v1293 = vmul.f32 %v1290, %v1292
        %v1294 = vadd.f32 %v1290, %v1293
        %vm1295 = vweird.f32 %v1290
        %v1296 = vsel %vm1295, %v1290, %v1294
        %v1297 = vmul.f32 %v1287, %v1296
        %v1298 = vmul.f32 %v1289, %v1296
        %v1299 = vsub.f32 %v1284, %v1297
        %v1300 = vsub.f32 %v1285, %v1298
        %v1301 = vmul.f32 %v1299, %v1299
        %v1302 = vmul.f32 %v1300, %v1300
        %1303 = vadd.xlane.f32.xlu0 %v1301
        %v1304 = vpop.xlane.xlu0 %1303
        %1305 = vadd.xlane.f32.xlu0 %v1302
        %v1306 = vpop.xlane.xlu0 %1305
        %v1307 = vmul.f32 %v1304, %v1296
        %v1308 = vmul.f32 %v1306, %v1296
        %v1309 = vadd.f32 %v1307, 1e-12
        %v1310 = vadd.f32 %v1308, 1e-12
        %v1311 = vrsqrt.pop %v1309
        %v1312 = vmul.f32 %v1311, %v1309
        %v1313 = vmul.f32 %v1312, %v1311
        %v1314 = vmul.f32 0.5, %v1313
        %v1315 = vsub.f32 1.5, %v1314
        %v1316 = vmul.f32 %v1311, %v1315
        %vm1317 = vweird.f32 %v1309
        %vm1318 = vweird.f32 %v1311
        %vm1319 = vmor %vm1317, %vm1318
        %v1320 = vsel %vm1319, %v1311, %v1316
        %v1321 = vrsqrt.pop %v1310
        %v1322 = vmul.f32 %v1321, %v1310
        %v1323 = vmul.f32 %v1322, %v1321
        %v1324 = vmul.f32 0.5, %v1323
        %v1325 = vsub.f32 1.5, %v1324
        %v1326 = vmul.f32 %v1321, %v1325
        %vm1327 = vweird.f32 %v1310
        %vm1328 = vweird.f32 %v1321
        %vm1329 = vmor %vm1327, %vm1328
        %v1330 = vsel %vm1329, %v1321, %v1326
        %v1331 = vmul.f32 %v1299, %v1320
        %v1332 = vmul.f32 %v1300, %v1330
        %v1333 = vmul.f32 %v1331, %v480
        %v1334 = vmul.f32 %v1332, %v480
        %v1335 = vadd.f32 %v1333, %v481
        %v1336 = vadd.f32 %v1334, %v481
        %v1337 = vpack.c.bf16 %v1336, %v1335
        %v1338 = vld [vmem:[%s407] sm:$0xff]
        %v1339 = vld [vmem:[%s407 + $0x8] sm:$0xff]
        %v1340 = vld [vmem:[%s407 + $0x10] sm:$0xff]
        %v1341 = vld [vmem:[%s407 + $0x18] sm:$0xff]
        %v1342 = vld [vmem:[%s407 + $0x20] sm:$0xff]
        %v1343 = vld [vmem:[%s407 + $0x28] sm:$0xff]
        %v1344 = vld [vmem:[%s407 + $0x30] sm:$0xff]
        %v1345 = vld [vmem:[%s407 + $0x38] sm:$0xff]
        %v1346 = vld [vmem:[%s407 + $0x40] sm:$0xff]
        %v1347 = vld [vmem:[%s407 + $0x48] sm:$0xff]
        %v1348 = vld [vmem:[%s407 + $0x50] sm:$0xff]
        %v1349 = vld [vmem:[%s407 + $0x58] sm:$0xff]
        %v1350 = vld [vmem:[%s407 + $0x60] sm:$0xff]
        %v1351 = vld [vmem:[%s407 + $0x68] sm:$0xff]
        %v1352 = vld [vmem:[%s407 + $0x70] sm:$0xff]
        %v1353 = vld [vmem:[%s407 + $0x78] sm:$0xff]
        %v1355 = vperm.slane %v478, 0
        %v1356 = vperm.slane %v478, 1
        %v1375 = vunpack.c.l.b16 %v1338
        %v1376 = vunpack.c.h.b16 %v1338
        %v1377 = vunpack.c.l.b16 %v1339
        %v1378 = vunpack.c.h.b16 %v1339
        %v1379 = vunpack.c.l.b16 %v1340
        %v1380 = vunpack.c.h.b16 %v1340
        %v1381 = vunpack.c.l.b16 %v1341
        %v1382 = vunpack.c.h.b16 %v1341
        %v1383 = vunpack.c.l.b16 %v1342
        %v1384 = vunpack.c.h.b16 %v1342
        %v1385 = vunpack.c.l.b16 %v1343
        %v1386 = vunpack.c.h.b16 %v1343
        %v1387 = vunpack.c.l.b16 %v1344
        %v1388 = vunpack.c.h.b16 %v1344
        %v1389 = vunpack.c.l.b16 %v1345
        %v1390 = vunpack.c.h.b16 %v1345
        %v1391 = vunpack.c.l.b16 %v1346
        %v1392 = vunpack.c.h.b16 %v1346
        %v1393 = vunpack.c.l.b16 %v1347
        %v1394 = vunpack.c.h.b16 %v1347
        %v1395 = vunpack.c.l.b16 %v1348
        %v1396 = vunpack.c.h.b16 %v1348
        %v1397 = vunpack.c.l.b16 %v1349
        %v1398 = vunpack.c.h.b16 %v1349
        %v1399 = vunpack.c.l.b16 %v1350
        %v1400 = vunpack.c.h.b16 %v1350
        %v1401 = vunpack.c.l.b16 %v1351
        %v1402 = vunpack.c.h.b16 %v1351
        %v1403 = vunpack.c.l.b16 %v1352
        %v1404 = vunpack.c.h.b16 %v1352
        %v1405 = vunpack.c.l.b16 %v1353
        %v1406 = vunpack.c.h.b16 %v1353
        %v1407 = vpack.c.b16 %v1377, %v1375
        %v1408 = vpack.c.b16 %v1378, %v1376
        %v1409 = vpack.c.b16 %v1381, %v1379
        %v1410 = vpack.c.b16 %v1382, %v1380
        %v1411 = vpack.c.b16 %v1385, %v1383
        %v1412 = vpack.c.b16 %v1386, %v1384
        %v1413 = vpack.c.b16 %v1389, %v1387
        %v1414 = vpack.c.b16 %v1390, %v1388
        %v1415 = vpack.c.b16 %v1393, %v1391
        %v1416 = vpack.c.b16 %v1394, %v1392
        %v1417 = vpack.c.b16 %v1397, %v1395
        %v1418 = vpack.c.b16 %v1398, %v1396
        %v1419 = vpack.c.b16 %v1401, %v1399
        %v1420 = vpack.c.b16 %v1402, %v1400
        %v1421 = vpack.c.b16 %v1405, %v1403
        %v1422 = vpack.c.b16 %v1406, %v1404
        %1439 = vmatpush.bf16.msra.mxu0 %v1421
        %1440 = vmatpush.bf16.msra.mxu0 %v1419
        %1441 = vmatpush.bf16.msra.mxu0 %v1417
        %1442 = vmatpush.bf16.msra.mxu0 %v1415
        %1443 = vmatpush.bf16.msra.mxu0 %v1413
        %1444 = vmatpush.bf16.msra.mxu0 %v1411
        %1445 = vmatpush.bf16.msra.mxu0 %v1409
        %1446 = vmatpush.bf16.msra.mxu0 %v1407
        %1447 = vmatmul.bf16.gmra.mxu0 %v1337
        %v1448 = vpop.f32.mrf.mxu0
        %v1449 = vadd.f32 %v1355, %v1448
        %v1450 = vpop.f32.mrf.mxu0
        %v1451 = vadd.f32 %v1355, %v1450
        %1452 = vdwg.mxu0
        %1453 = vmatpush.bf16.msra.mxu0 %v1422
        %1454 = vmatpush.bf16.msra.mxu0 %v1420
        %1455 = vmatpush.bf16.msra.mxu0 %v1418
        %1456 = vmatpush.bf16.msra.mxu0 %v1416
        %1457 = vmatpush.bf16.msra.mxu0 %v1414
        %1458 = vmatpush.bf16.msra.mxu0 %v1412
        %1459 = vmatpush.bf16.msra.mxu0 %v1410
        %1460 = vmatpush.bf16.msra.mxu0 %v1408
        %1461 = vmatmul.bf16.gmra.mxu0 %v1337
        %v1462 = vpop.f32.mrf.mxu0
        %v1463 = vadd.f32 %v1356, %v1462
        %v1464 = vpop.f32.mrf.mxu0
        %v1465 = vadd.f32 %v1356, %v1464
        %1466 = vdwg.mxu0
        %v1467 = vmul.f32 %v1449, 0.5
        %v1468 = vmul.f32 %v1463, 0.5
        %v1469 = vmul.f32 %v1451, 0.5
        %v1470 = vmul.f32 %v1465, 0.5
        %v1471 = vmul.f32 %v1449, 0.70710677
        %v1472 = vmul.f32 %v1463, 0.70710677
        %v1473 = vmul.f32 %v1451, 0.70710677
        %v1474 = vmul.f32 %v1465, 0.70710677
        %vm1475 = vcmp.ge.f32.partialorder %v1471, 0.0
        %vm1476 = vcmp.ge.f32.partialorder %v1472, 0.0
        %vm1477 = vcmp.ge.f32.partialorder %v1473, 0.0
        %vm1478 = vcmp.ge.f32.partialorder %v1474, 0.0
        %v1479 = vsel %vm1475, 1.0, -1.0
        %v1480 = vsel %vm1476, 1.0, -1.0
        %v1481 = vsel %vm1477, 1.0, -1.0
        %v1482 = vsel %vm1478, 1.0, -1.0
        %v1483 = vand.u32 2147483647, %v1471
        %v1484 = vand.u32 2147483647, %v1472
        %v1485 = vand.u32 2147483647, %v1473
        %v1486 = vand.u32 2147483647, %v1474
        %v1487 = vmul.f32 %v1483, 0.3275911
        %v1488 = vmul.f32 %v1484, 0.3275911
        %v1489 = vmul.f32 %v1485, 0.3275911
        %v1490 = vmul.f32 %v1486, 0.3275911
        %v1491 = vadd.f32 %v1487, 1.0
        %v1492 = vadd.f32 %v1488, 1.0
        %v1493 = vadd.f32 %v1489, 1.0
        %v1494 = vadd.f32 %v1490, 1.0
        %v1495 = vrcp.pop %v1491
        %v1496 = vmul.f32 %v1491, %v1495
        %v1497 = vsub.f32 1.0, %v1496
        %v1498 = vmul.f32 %v1495, %v1497
        %v1499 = vadd.f32 %v1495, %v1498
        %vm1500 = vweird.f32 %v1491
        %vm1501 = vweird.f32 %v1495
        %vm1502 = vmor %vm1500, %vm1501
        %v1503 = vsel %vm1502, %v1495, %v1499
        %v1504 = vand.u32 2147483647, %v1491
        %vm1505 = vcmp.eq.f32.partialorder %v1504, 8.507059e+37
        %v1506 = vand.u32 %v1491, 2147483648
        %v1507 = vor.u32 1.1754944e-38, %v1506
        %v1508 = vsel %vm1505, %v1507, %v1503
        %v1509 = vmul.f32 1.0, %v1508
        %v1510 = vrcp.pop %v1492
        %v1511 = vmul.f32 %v1492, %v1510
        %v1512 = vsub.f32 1.0, %v1511
        %v1513 = vmul.f32 %v1510, %v1512
        %v1514 = vadd.f32 %v1510, %v1513
        %vm1515 = vweird.f32 %v1492
        %vm1516 = vweird.f32 %v1510
        %vm1517 = vmor %vm1515, %vm1516
        %v1518 = vsel %vm1517, %v1510, %v1514
        %v1519 = vand.u32 2147483647, %v1492
        %vm1520 = vcmp.eq.f32.partialorder %v1519, 8.507059e+37
        %v1521 = vand.u32 %v1492, 2147483648
        %v1522 = vor.u32 1.1754944e-38, %v1521
        %v1523 = vsel %vm1520, %v1522, %v1518
        %v1524 = vmul.f32 1.0, %v1523
        %v1525 = vrcp.pop %v1493
        %v1526 = vmul.f32 %v1493, %v1525
        %v1527 = vsub.f32 1.0, %v1526
        %v1528 = vmul.f32 %v1525, %v1527
        %v1529 = vadd.f32 %v1525, %v1528
        %vm1530 = vweird.f32 %v1493
        %vm1531 = vweird.f32 %v1525
        %vm1532 = vmor %vm1530, %vm1531
        %v1533 = vsel %vm1532, %v1525, %v1529
        %v1534 = vand.u32 2147483647, %v1493
        %vm1535 = vcmp.eq.f32.partialorder %v1534, 8.507059e+37
        %v1536 = vand.u32 %v1493, 2147483648
        %v1537 = vor.u32 1.1754944e-38, %v1536
        %v1538 = vsel %vm1535, %v1537, %v1533
        %v1539 = vmul.f32 1.0, %v1538
        %v1540 = vrcp.pop %v1494
        %v1541 = vmul.f32 %v1494, %v1540
        %v1542 = vsub.f32 1.0, %v1541
        %v1543 = vmul.f32 %v1540, %v1542
        %v1544 = vadd.f32 %v1540, %v1543
        %vm1545 = vweird.f32 %v1494
        %vm1546 = vweird.f32 %v1540
        %vm1547 = vmor %vm1545, %vm1546
        %v1548 = vsel %vm1547, %v1540, %v1544
        %v1549 = vand.u32 2147483647, %v1494
        %vm1550 = vcmp.eq.f32.partialorder %v1549, 8.507059e+37
        %v1551 = vand.u32 %v1494, 2147483648
        %v1552 = vor.u32 1.1754944e-38, %v1551
        %v1553 = vsel %vm1550, %v1552, %v1548
        %v1554 = vmul.f32 1.0, %v1553
        %v1555 = vmul.f32 %v1509, 1.0614054
        %v1556 = vmul.f32 %v1524, 1.0614054
        %v1557 = vmul.f32 %v1539, 1.0614054
        %v1558 = vmul.f32 %v1554, 1.0614054
        %v1559 = vadd.f32 %v1555, -1.4531521
        %v1560 = vadd.f32 %v1556, -1.4531521
        %v1561 = vadd.f32 %v1557, -1.4531521
        %v1562 = vadd.f32 %v1558, -1.4531521
        %v1563 = vmul.f32 %v1559, %v1509
        %v1564 = vmul.f32 %v1560, %v1524
        %v1565 = vmul.f32 %v1561, %v1539
        %v1566 = vmul.f32 %v1562, %v1554
        %v1567 = vadd.f32 %v1563, 1.4214138
        %v1568 = vadd.f32 %v1564, 1.4214138
        %v1569 = vadd.f32 %v1565, 1.4214138
        %v1570 = vadd.f32 %v1566, 1.4214138
        %v1571 = vmul.f32 %v1567, %v1509
        %v1572 = vmul.f32 %v1568, %v1524
        %v1573 = vmul.f32 %v1569, %v1539
        %v1574 = vmul.f32 %v1570, %v1554
        %v1575 = vadd.f32 %v1571, -0.28449672
        %v1576 = vadd.f32 %v1572, -0.28449672
        %v1577 = vadd.f32 %v1573, -0.28449672
        %v1578 = vadd.f32 %v1574, -0.28449672
        %v1579 = vmul.f32 %v1575, %v1509
        %v1580 = vmul.f32 %v1576, %v1524
        %v1581 = vmul.f32 %v1577, %v1539
        %v1582 = vmul.f32 %v1578, %v1554
        %v1583 = vadd.f32 %v1579, 0.2548296
        %v1584 = vadd.f32 %v1580, 0.2548296
        %v1585 = vadd.f32 %v1581, 0.2548296
        %v1586 = vadd.f32 %v1582, 0.2548296
        %v1587 = vmul.f32 %v1583, %v1509
        %v1588 = vmul.f32 %v1584, %v1524
        %v1589 = vmul.f32 %v1585, %v1539
        %v1590 = vmul.f32 %v1586, %v1554
        %v1591 = vsub.f32 0.0, %v1483
        %v1592 = vsub.f32 0.0, %v1484
        %v1593 = vsub.f32 0.0, %v1485
        %v1594 = vsub.f32 0.0, %v1486
        %v1595 = vmul.f32 %v1591, %v1483
        %v1596 = vmul.f32 %v1592, %v1484
        %v1597 = vmul.f32 %v1593, %v1485
        %v1598 = vmul.f32 %v1594, %v1486
        %v1599 = vmul.f32 %v1595, 1.442695
        %v1600 = vpow.pop %v1599
        %v1601 = vmul.f32 %v1596, 1.442695
        %v1602 = vpow.pop %v1601
        %v1603 = vmul.f32 %v1597, 1.442695
        %v1604 = vpow.pop %v1603
        %v1605 = vmul.f32 %v1598, 1.442695
        %v1606 = vpow.pop %v1605
        %v1607 = vmul.f32 %v1587, %v1600
        %v1608 = vmul.f32 %v1588, %v1602
        %v1609 = vmul.f32 %v1589, %v1604
        %v1610 = vmul.f32 %v1590, %v1606
        %v1611 = vsub.f32 1.0, %v1607
        %v1612 = vsub.f32 1.0, %v1608
        %v1613 = vsub.f32 1.0, %v1609
        %v1614 = vsub.f32 1.0, %v1610
        %v1615 = vmul.f32 %v1479, %v1611
        %v1616 = vmul.f32 %v1480, %v1612
        %v1617 = vmul.f32 %v1481, %v1613
        %v1618 = vmul.f32 %v1482, %v1614
        %v1619 = vadd.f32 %v1615, 1.0
        %v1620 = vadd.f32 %v1616, 1.0
        %v1621 = vadd.f32 %v1617, 1.0
        %v1622 = vadd.f32 %v1618, 1.0
        %v1623 = vmul.f32 %v1467, %v1619
        %v1624 = vmul.f32 %v1468, %v1620
        %v1625 = vmul.f32 %v1469, %v1621
        %v1626 = vmul.f32 %v1470, %v1622
        %v1627 = vpack.c.bf16 %v1625, %v1623
        %v1628 = vpack.c.bf16 %v1626, %v1624
        %v1629 = vld [vmem:[%s417] sm:$0xf]
        %v1630 = vld [vmem:[%s417 + $0x4] sm:$0xf]
        %v1631 = vld [vmem:[%s417 + $0x8] sm:$0xf]
        %v1632 = vld [vmem:[%s417 + $0xc] sm:$0xf]
        %v1633 = vld [vmem:[%s417 + $0x10] sm:$0xf]
        %v1634 = vld [vmem:[%s417 + $0x14] sm:$0xf]
        %v1635 = vld [vmem:[%s417 + $0x18] sm:$0xf]
        %v1636 = vld [vmem:[%s417 + $0x1c] sm:$0xf]
        %v1637 = vld [vmem:[%s417 + $0x20] sm:$0xf]
        %v1638 = vld [vmem:[%s417 + $0x24] sm:$0xf]
        %v1639 = vld [vmem:[%s417 + $0x28] sm:$0xf]
        %v1640 = vld [vmem:[%s417 + $0x2c] sm:$0xf]
        %v1641 = vld [vmem:[%s417 + $0x30] sm:$0xf]
        %v1642 = vld [vmem:[%s417 + $0x34] sm:$0xf]
        %v1643 = vld [vmem:[%s417 + $0x38] sm:$0xf]
        %v1644 = vld [vmem:[%s417 + $0x3c] sm:$0xf]
        %v1645 = vld [vmem:[%s417 + $0x40] sm:$0xf]
        %v1646 = vld [vmem:[%s417 + $0x44] sm:$0xf]
        %v1647 = vld [vmem:[%s417 + $0x48] sm:$0xf]
        %v1648 = vld [vmem:[%s417 + $0x4c] sm:$0xf]
        %v1649 = vld [vmem:[%s417 + $0x50] sm:$0xf]
        %v1650 = vld [vmem:[%s417 + $0x54] sm:$0xf]
        %v1651 = vld [vmem:[%s417 + $0x58] sm:$0xf]
        %v1652 = vld [vmem:[%s417 + $0x5c] sm:$0xf]
        %v1653 = vld [vmem:[%s417 + $0x60] sm:$0xf]
        %v1654 = vld [vmem:[%s417 + $0x64] sm:$0xf]
        %v1655 = vld [vmem:[%s417 + $0x68] sm:$0xf]
        %v1656 = vld [vmem:[%s417 + $0x6c] sm:$0xf]
        %v1657 = vld [vmem:[%s417 + $0x70] sm:$0xf]
        %v1658 = vld [vmem:[%s417 + $0x74] sm:$0xf]
        %v1659 = vld [vmem:[%s417 + $0x78] sm:$0xf]
        %v1660 = vld [vmem:[%s417 + $0x7c] sm:$0xf]
        %v1693 = vunpack.c.l.b16 %v1629
        %v1694 = vunpack.c.l.b16 %v1630
        %v1695 = vunpack.c.l.b16 %v1631
        %v1696 = vunpack.c.l.b16 %v1632
        %v1697 = vunpack.c.l.b16 %v1633
        %v1698 = vunpack.c.l.b16 %v1634
        %v1699 = vunpack.c.l.b16 %v1635
        %v1700 = vunpack.c.l.b16 %v1636
        %v1701 = vunpack.c.l.b16 %v1637
        %v1702 = vunpack.c.l.b16 %v1638
        %v1703 = vunpack.c.l.b16 %v1639
        %v1704 = vunpack.c.l.b16 %v1640
        %v1705 = vunpack.c.l.b16 %v1641
        %v1706 = vunpack.c.l.b16 %v1642
        %v1707 = vunpack.c.l.b16 %v1643
        %v1708 = vunpack.c.l.b16 %v1644
        %v1709 = vunpack.c.l.b16 %v1645
        %v1710 = vunpack.c.l.b16 %v1646
        %v1711 = vunpack.c.l.b16 %v1647
        %v1712 = vunpack.c.l.b16 %v1648
        %v1713 = vunpack.c.l.b16 %v1649
        %v1714 = vunpack.c.l.b16 %v1650
        %v1715 = vunpack.c.l.b16 %v1651
        %v1716 = vunpack.c.l.b16 %v1652
        %v1717 = vunpack.c.l.b16 %v1653
        %v1718 = vunpack.c.l.b16 %v1654
        %v1719 = vunpack.c.l.b16 %v1655
        %v1720 = vunpack.c.l.b16 %v1656
        %v1721 = vunpack.c.l.b16 %v1657
        %v1722 = vunpack.c.l.b16 %v1658
        %v1723 = vunpack.c.l.b16 %v1659
        %v1724 = vunpack.c.l.b16 %v1660
        %v1725 = vpack.c.b16 %v1694, %v1693
        %v1726 = vpack.c.b16 %v1696, %v1695
        %v1727 = vpack.c.b16 %v1698, %v1697
        %v1728 = vpack.c.b16 %v1700, %v1699
        %v1729 = vpack.c.b16 %v1702, %v1701
        %v1730 = vpack.c.b16 %v1704, %v1703
        %v1731 = vpack.c.b16 %v1706, %v1705
        %v1732 = vpack.c.b16 %v1708, %v1707
        %v1733 = vpack.c.b16 %v1710, %v1709
        %v1734 = vpack.c.b16 %v1712, %v1711
        %v1735 = vpack.c.b16 %v1714, %v1713
        %v1736 = vpack.c.b16 %v1716, %v1715
        %v1737 = vpack.c.b16 %v1718, %v1717
        %v1738 = vpack.c.b16 %v1720, %v1719
        %v1739 = vpack.c.b16 %v1722, %v1721
        %v1740 = vpack.c.b16 %v1724, %v1723
        %1757 = vmatpush.bf16.msra.mxu0 %v1732
        %1758 = vmatpush.bf16.msra.mxu0 %v1731
        %1759 = vmatpush.bf16.msra.mxu0 %v1730
        %1760 = vmatpush.bf16.msra.mxu0 %v1729
        %1761 = vmatpush.bf16.msra.mxu0 %v1728
        %1762 = vmatpush.bf16.msra.mxu0 %v1727
        %1763 = vmatpush.bf16.msra.mxu0 %v1726
        %1764 = vmatpush.bf16.msra.mxu0 %v1725
        %1765 = vmatmul.bf16.gmra.mxu0 %v1627
        %v1766 = vpop.f32.mrf.mxu0
        %v1767 = vadd.f32 %v479, %v1766
        %v1768 = vpop.f32.mrf.mxu0
        %v1769 = vadd.f32 %v479, %v1768
        %1770 = vdwg.mxu0
        %1771 = vmatpush.bf16.msra.mxu0 %v1740
        %1772 = vmatpush.bf16.msra.mxu0 %v1739
        %1773 = vmatpush.bf16.msra.mxu0 %v1738
        %1774 = vmatpush.bf16.msra.mxu0 %v1737
        %1775 = vmatpush.bf16.msra.mxu0 %v1736
        %1776 = vmatpush.bf16.msra.mxu0 %v1735
        %1777 = vmatpush.bf16.msra.mxu0 %v1734
        %1778 = vmatpush.bf16.msra.mxu0 %v1733
        %1779 = vmatmul.bf16.gmra.mxu0 %v1628
        %v1780 = vpop.f32.mrf.mxu0
        %v1781 = vadd.f32 %v1767, %v1780
        %v1782 = vpop.f32.mrf.mxu0
        %v1783 = vadd.f32 %v1769, %v1782
        %1784 = vdwg.mxu0
        %v1785 = vadd.f32 %v1781, %v1335
        %v1786 = vadd.f32 %v1783, %v1336
        %1787 = vadd.xlane.f32.xlu0 %v1785
        %v1788 = vpop.xlane.xlu0 %1787
        %1789 = vadd.xlane.f32.xlu0 %v1786
        %v1790 = vpop.xlane.xlu0 %1789
        %v1791 = vmul.f32 %v1788, %v1296
        %v1792 = vmul.f32 %v1790, %v1296
        %v1793 = vsub.f32 %v1785, %v1791
        %v1794 = vsub.f32 %v1786, %v1792
        %v1795 = vmul.f32 %v1793, %v1793
        %v1796 = vmul.f32 %v1794, %v1794
        %1797 = vadd.xlane.f32.xlu0 %v1795
        %v1798 = vpop.xlane.xlu0 %1797
        %1799 = vadd.xlane.f32.xlu0 %v1796
        %v1800 = vpop.xlane.xlu0 %1799
        %v1801 = vmul.f32 %v1798, %v1296
        %v1802 = vmul.f32 %v1800, %v1296
        %v1803 = vadd.f32 %v1801, 1e-12
        %v1804 = vadd.f32 %v1802, 1e-12
        %v1805 = vrsqrt.pop %v1803
        %v1806 = vmul.f32 %v1805, %v1803
        %v1807 = vmul.f32 %v1806, %v1805
        %v1808 = vmul.f32 0.5, %v1807
        %v1809 = vsub.f32 1.5, %v1808
        %v1810 = vmul.f32 %v1805, %v1809
        %vm1811 = vweird.f32 %v1803
        %vm1812 = vweird.f32 %v1805
        %vm1813 = vmor %vm1811, %vm1812
        %v1814 = vsel %vm1813, %v1805, %v1810
        %v1815 = vrsqrt.pop %v1804
        %v1816 = vmul.f32 %v1815, %v1804
        %v1817 = vmul.f32 %v1816, %v1815
        %v1818 = vmul.f32 0.5, %v1817
        %v1819 = vsub.f32 1.5, %v1818
        %v1820 = vmul.f32 %v1815, %v1819
        %vm1821 = vweird.f32 %v1804
        %vm1822 = vweird.f32 %v1815
        %vm1823 = vmor %vm1821, %vm1822
        %v1824 = vsel %vm1823, %v1815, %v1820
        %v1825 = vmul.f32 %v1793, %v1814
        %v1826 = vmul.f32 %v1794, %v1824
        %v1827 = vmul.f32 %v1825, %v482
        %v1828 = vmul.f32 %v1826, %v482
        %v1829 = vadd.f32 %v1827, %v483
        %v1830 = vadd.f32 %v1828, %v483
        %1831 = vst [vmem:[#allocation2] sm:$0xff] %v1829
        %1832 = vst [vmem:[#allocation2 + $0x8] sm:$0xff] %v1830
        %p1833 = scmp.eq.s32.totalorder %s21, 1
        // Predicated region
        $region81: #{tpu_custom_call.1} parent=47 // pred_check
          %p1834 = pneg %p1833
        $region82: #{tpu_custom_call.1} parent=47 // pred_check_branch
          %1836 = sbr.rel (%p1834) target = $region84
        $region83: #{tpu_custom_call.1} parent=47 // pred_region
          %v1838 = vrot.slane %v1830, 7
          %vm1840 = vcmask 1040384
          %v1841 = vsel %vm1840, %v1829, %v1838
          %1842 = vst [vmem:[#allocation13] sm:$0x3] %v1841
        $region84: #{tpu_custom_call.1} parent=47 // pred_fallthru
          _
        // Predicated region
        $region85: #{tpu_custom_call.1} parent=47 // pred_check
          %p1843 = pneg %p206
        $region86: #{tpu_custom_call.1} parent=47 // pred_check_branch
          %1845 = sbr.rel (%p1843) target = $region88
        $region87: #{tpu_custom_call.1} parent=47 // pred_region
          %1847 = vsyncadd [#allocation5], 0
          %s1849 = sshll.u32 [#allocation13], 4
          %s1850 = int_to_ptr.vmem [resolvable:$true] %s1849
          %s1851 = sshll.u32 %s7, 4
          %s1852 = int_to_ptr.hbm [resolvable:$true] %s1851
          %1854 = dma.vmem_to_hbm [thread:$0]  %s1850, 32, %s1852, [#allocation5]
        $region88: #{tpu_custom_call.1} parent=47 // pred_fallthru
          _
        // Predicated region
        $region89: #{tpu_custom_call.1} parent=47 // pred_check
          %p1855 = pneg %p206
        $region90: #{tpu_custom_call.1} parent=47 // pred_check_branch
          %1857 = sbr.rel (%p1855) target = $region92
        $region91: #{tpu_custom_call.1} parent=47 // pred_region
          %1859 = dma.done [#allocation5], 32
        $region92: #{tpu_custom_call.1} parent=47 // pred_fallthru
          _
      $region48: #{tpu_custom_call.1} parent=5 // pred_fallthru
        _
      %p1860 = scmp.le.s32.totalorder 2, %s16
      // Predicated region
      $region93: #{tpu_custom_call.1} parent=5 // pred_check
        %p1861 = pneg %p1860
      $region94: #{tpu_custom_call.1} parent=5 // pred_check_branch
        %1863 = sbr.rel (%p1861) target = $region96
      $region95: #{tpu_custom_call.1} parent=5 // pred_region
        %s1864 = ssub.s32 %s16, 2
      $region96: #{tpu_custom_call.1} parent=5 // pred_fallthru
        _
    $region6: #{tpu_custom_call.1} parent=1 // loop_footer
      %s20 = sadd.s32 1, %s16
    $region7: #{tpu_custom_call.1} parent=1 // loop_footer_branch
      %15 = sbr.rel target = $region3
    $region8: #{tpu_custom_call.1} parent=1 // loop_exit
      _
    %1865 = vsyncpa [#allocation4], 1
    %s1866 = scalar_lea.sflag [#allocation4], 1
    %1867 = vsyncpa %s1866, 1
    %1868 = vsyncpa [#allocation7], 1
    %1869 = vsyncpa [#allocation5], 1
    %s1870 = scalar_lea.sflag [#allocation5], 1
    %1871 = vsyncpa %s1870, 1

</llo_original>
